<compile_context>
chip_gen: v7x
topology: tpu7x:2x2x1
jax: 0.10.0
libtpu: 0.0.40
codegen_flags: <defaults>
</compile_context>

<pallas_src>
import functools

import jax
import jax.numpy as jnp
from jax import lax
from jax.experimental import pallas as pl
from jax.experimental.pallas import tpu as pltpu


def mha_kernel(z_ref, wq_ref, wk_ref, wv_ref, wo_ref, out_ref, *, num_heads):
    """All heads in one invocation; per-head loop statically unrolled."""
    z = z_ref[...]                                                    # (N, d_in) f32
    acc = jnp.zeros(out_ref.shape, jnp.float32)                      # (N, d_o_pad)

    for h in range(num_heads):                        # static unroll (H small)
        # Leading-dim head indexing of the 3-D weight refs is free
        # (tile-aligned); no lane-offset slicing anywhere in the loop.
        qh = jnp.dot(z, wq_ref[h], preferred_element_type=jnp.float32)   # (N, d_q)
        kh = jnp.dot(z, wk_ref[h], preferred_element_type=jnp.float32)   # (N, d_q)
        vh = jnp.dot(z, wv_ref[h], preferred_element_type=jnp.float32)   # (N, d_v)

        # q @ k^T without materializing a transposed tile (contract dim 1 of both).
        s = lax.dot_general(qh, kh,
                            dimension_numbers=(((1,), (1,)), ((), ())),
                            preferred_element_type=jnp.float32)          # (N, N)

        m = jnp.max(s, axis=-1, keepdims=True)
        e = jnp.exp(s - m)
        l = jnp.sum(e, axis=-1, keepdims=True)

        # Normalize AFTER the PV matmul (N*d_v muls, not N*N); exact reciprocal
        # so softmax rows sum to exactly 1 (it's only an (N,1) EUP op).
        o_h = jnp.dot(e, vh, preferred_element_type=jnp.float32) * pl.reciprocal(l)

        # Per-head combinator accumulation (replaces lane-axis concat).
        acc = acc + jnp.dot(o_h, wo_ref[h], preferred_element_type=jnp.float32)

    out_ref[...] = acc.astype(out_ref.dtype)          # lane-dense (d_o padded to 128k)


def pack_mha_params(wq, wk, wv, w_comb):
    """One-time weight repacking. Call at parameter-init time, NOT per forward.

    wq, wk : (H, d_q, d_in)   per-head nn.Linear weights (PyTorch layout)
    wv     : (H, d_v, d_in)
    w_comb : (d_o, H*d_v)     combinator nn.Linear weight (PyTorch layout)
    """
    H, d_q, d_in = wq.shape
    d_v = wv.shape[1]
    d_o = w_comb.shape[0]

    # Scale derived from the actual query dimension (wq.shape[1]), folded into Wq.
    scale = jnp.float32(d_q) ** jnp.float32(-0.5)

    wq_p = jnp.transpose(wq, (0, 2, 1)).astype(jnp.float32) * scale   # (H, d_in, d_q)
    wk_p = jnp.transpose(wk, (0, 2, 1)).astype(jnp.float32)           # (H, d_in, d_q)
    wv_p = jnp.transpose(wv, (0, 2, 1)).astype(jnp.float32)           # (H, d_in, d_v)

    # Combinator: (d_o, H*d_v) -> per-head (H, d_v, d_o_pad), output dim padded
    # to a multiple of 128 so the kernel's store is lane-dense (unmasked vst).
    d_o_pad = ((d_o + 127) // 128) * 128
    wo_p = jnp.transpose(w_comb, (1, 0)).reshape(H, d_v, d_o)
    if d_o_pad != d_o:
        wo_p = jnp.pad(wo_p, ((0, 0), (0, 0), (0, d_o_pad - d_o)))

    return (wq_p, wk_p, wv_p, wo_p.astype(jnp.float32)), d_o


def multi_head_attention(z, packed_params, d_o):
    """Forward pass. `packed_params` comes from pack_mha_params (init-time)."""
    wq_p, wk_p, wv_p, wo_p = packed_params
    N, d_in = z.shape
    H, _, d_q = wq_p.shape
    d_v = wv_p.shape[2]
    d_o_pad = wo_p.shape[2]

    # Advisory cost estimate for XLA's scheduler around the custom call.
    flops = H * (2 * N * d_in * (2 * d_q + d_v)        # Q, K, V projections
                 + 2 * N * N * d_q                      # scores
                 + 2 * N * N * d_v                      # PV
                 + 2 * N * d_v * d_o_pad)               # combinator
    transcendentals = H * (N * N + N)                   # exp + reciprocal
    bytes_accessed = 4 * (z.size + wq_p.size + wk_p.size + wv_p.size
                          + wo_p.size + N * d_o_pad)

    kernel = functools.partial(mha_kernel, num_heads=H)

    out = pl.pallas_call(
        kernel,
        out_shape=jax.ShapeDtypeStruct((N, d_o_pad), z.dtype),
        # No grid: single invocation, whole arrays resident in VMEM, no
        # pipelining machinery to pay for.
        in_specs=[pl.BlockSpec(memory_space=pltpu.MemorySpace.VMEM)] * 5,
        out_specs=pl.BlockSpec(memory_space=pltpu.MemorySpace.VMEM),
        cost_estimate=pl.CostEstimate(flops=flops,
                                      transcendentals=transcendentals,
                                      bytes_accessed=bytes_accessed),
    )(z, wq_p, wk_p, wv_p, wo_p)

    return out[:, :d_o]


def reference_mha(z, wq, wk, wv, w_comb, *, query_dim):
    """Pure-JAX reference mirroring the PyTorch forward exactly."""
    heads = []
    for h in range(wq.shape[0]):
        q = z @ wq[h].T
        k = z @ wk[h].T
        v = z @ wv[h].T
        s = (q @ k.T) * (query_dim ** -0.5)
        p = jax.nn.softmax(s, axis=-1)
        heads.append(p @ v)
    return jnp.concatenate(heads, axis=-1) @ w_comb.T


if __name__ == "__main__":
    # Module hyperparameters (small, consistent with the forward pass).
    num_heads = 4
    input_dim = 32      # d_in
    query_dim = 16      # d_q
    head_dim = 16       # d_v
    encoding_dim = 32   # d_o
    N = 8               # sequence length

    key = jax.random.PRNGKey(0)
    kz, kq, kk, kv, ko = jax.random.split(key, 5)

    # init_policy=None equivalent: normal(mean=0, std=0.02) for all weights.
    z = jax.random.normal(kz, (N, input_dim), dtype=jnp.float32)
    wq = 0.02 * jax.random.normal(kq, (num_heads, query_dim, input_dim), jnp.float32)
    wk = 0.02 * jax.random.normal(kk, (num_heads, query_dim, input_dim), jnp.float32)
    wv = 0.02 * jax.random.normal(kv, (num_heads, head_dim, input_dim), jnp.float32)
    w_comb = 0.02 * jax.random.normal(
        ko, (encoding_dim, num_heads * head_dim), jnp.float32)

    # One-time weight packing (init-time), off the per-call critical path.
    packed_params, d_o = pack_mha_params(wq, wk, wv, w_comb)
    packed_params = jax.block_until_ready(packed_params)

    out = multi_head_attention(z, packed_params, d_o)
    out = jax.block_until_ready(out)

    ref = reference_mha(z, wq, wk, wv, w_comb, query_dim=query_dim)
    assert out.shape == (N, encoding_dim)
    assert jnp.allclose(out, ref, atol=1e-5, rtol=1e-5), "mismatch vs reference"

    print("KERNEL_OK")
</pallas_src>

<mosaic_0001>
module attributes {stable_mosaic.version = 11 : i64} {
  func.func @mha_kernel(%arg0: memref<8x32xf32, #tpu.memory_space<vmem>>, %arg1: memref<4x32x16xf32, #tpu.memory_space<vmem>>, %arg2: memref<4x32x16xf32, #tpu.memory_space<vmem>>, %arg3: memref<4x32x16xf32, #tpu.memory_space<vmem>>, %arg4: memref<4x16x128xf32, #tpu.memory_space<vmem>>, %arg5: memref<8x128xf32, #tpu.memory_space<vmem>>) attributes {dimension_semantics = [], scalar_prefetch = 0 : i64, scratch_operands = 0 : i64, tpu.core_type = #tpu.core_type<tc>} {
    %c0 = arith.constant 0 : index
    %c0_0 = arith.constant 0 : index
    %0 = vector.load %arg0[%c0, %c0_0] : memref<8x32xf32, #tpu.memory_space<vmem>>, vector<8x32xf32>
    %cst = arith.constant 0.000000e+00 : f32
    %1 = vector.broadcast %cst : f32 to vector<8x128xf32>
    %c0_1 = arith.constant 0 : index
    %c0_2 = arith.constant 0 : index
    %c0_3 = arith.constant 0 : index
    %2 = vector.load %arg1[%c0_1, %c0_2, %c0_3] : memref<4x32x16xf32, #tpu.memory_space<vmem>>, vector<1x32x16xf32>
    %3 = vector.shape_cast %2 : vector<1x32x16xf32> to vector<32x16xf32>
    %cst_4 = arith.constant dense<0.000000e+00> : vector<8x16xf32>
    %4 = tpu.matmul %0, %3, %cst_4 {dimension_numbers = #tpu.dot_dimension_numbers<[1], [0], [0], [1], [0, 0, 1, 1], [], []>} : vector<8x32xf32>, vector<32x16xf32>, vector<8x16xf32> -> vector<8x16xf32>
    %c0_5 = arith.constant 0 : index
    %c0_6 = arith.constant 0 : index
    %c0_7 = arith.constant 0 : index
    %5 = vector.load %arg2[%c0_5, %c0_6, %c0_7] : memref<4x32x16xf32, #tpu.memory_space<vmem>>, vector<1x32x16xf32>
    %6 = vector.shape_cast %5 : vector<1x32x16xf32> to vector<32x16xf32>
    %cst_8 = arith.constant dense<0.000000e+00> : vector<8x16xf32>
    %7 = tpu.matmul %0, %6, %cst_8 {dimension_numbers = #tpu.dot_dimension_numbers<[1], [0], [0], [1], [0, 0, 1, 1], [], []>} : vector<8x32xf32>, vector<32x16xf32>, vector<8x16xf32> -> vector<8x16xf32>
    %c0_9 = arith.constant 0 : index
    %c0_10 = arith.constant 0 : index
    %c0_11 = arith.constant 0 : index
    %8 = vector.load %arg3[%c0_9, %c0_10, %c0_11] : memref<4x32x16xf32, #tpu.memory_space<vmem>>, vector<1x32x16xf32>
    %9 = vector.shape_cast %8 : vector<1x32x16xf32> to vector<32x16xf32>
    %cst_12 = arith.constant dense<0.000000e+00> : vector<8x16xf32>
    %10 = tpu.matmul %0, %9, %cst_12 {dimension_numbers = #tpu.dot_dimension_numbers<[1], [0], [0], [1], [0, 0, 1, 1], [], []>} : vector<8x32xf32>, vector<32x16xf32>, vector<8x16xf32> -> vector<8x16xf32>
    %cst_13 = arith.constant dense<0.000000e+00> : vector<8x8xf32>
    %11 = tpu.matmul %4, %7, %cst_13 {dimension_numbers = #tpu.dot_dimension_numbers<[1], [1], [0], [0], [0, 0, 1, 0], [], []>} : vector<8x16xf32>, vector<8x16xf32>, vector<8x8xf32> -> vector<8x8xf32>
    %cst_14 = arith.constant dense<0xFF800000> : vector<8xf32>
    %12 = vector.multi_reduction <maximumf>, %11, %cst_14 [1] : vector<8x8xf32> to vector<8xf32>
    %13 = vector.shape_cast %12 : vector<8xf32> to vector<8x1xf32>
    %14 = vector.broadcast %13 : vector<8x1xf32> to vector<8x8xf32>
    %15 = arith.subf %11, %14 : vector<8x8xf32>
    %16 = math.exp %15 : vector<8x8xf32>
    %cst_15 = arith.constant dense<0.000000e+00> : vector<8xf32>
    %17 = vector.multi_reduction <add>, %16, %cst_15 [1] : vector<8x8xf32> to vector<8xf32>
    %18 = vector.shape_cast %17 : vector<8xf32> to vector<8x1xf32>
    %cst_16 = arith.constant dense<0.000000e+00> : vector<8x16xf32>
    %19 = tpu.matmul %16, %10, %cst_16 {dimension_numbers = #tpu.dot_dimension_numbers<[1], [0], [0], [1], [0, 0, 1, 1], [], []>} : vector<8x8xf32>, vector<8x16xf32>, vector<8x16xf32> -> vector<8x16xf32>
    %20 = tpu.reciprocal %18 : vector<8x1xf32> -> vector<8x1xf32>
    %21 = vector.broadcast %20 : vector<8x1xf32> to vector<8x16xf32>
    %22 = arith.mulf %19, %21 : vector<8x16xf32>
    %c0_17 = arith.constant 0 : index
    %c0_18 = arith.constant 0 : index
    %c0_19 = arith.constant 0 : index
    %23 = vector.load %arg4[%c0_17, %c0_18, %c0_19] : memref<4x16x128xf32, #tpu.memory_space<vmem>>, vector<1x16x128xf32>
    %24 = vector.shape_cast %23 : vector<1x16x128xf32> to vector<16x128xf32>
    %cst_20 = arith.constant dense<0.000000e+00> : vector<8x128xf32>
    %25 = tpu.matmul %22, %24, %cst_20 {dimension_numbers = #tpu.dot_dimension_numbers<[1], [0], [0], [1], [0, 0, 1, 1], [], []>} : vector<8x16xf32>, vector<16x128xf32>, vector<8x128xf32> -> vector<8x128xf32>
    %26 = arith.addf %1, %25 : vector<8x128xf32>
    %c1 = arith.constant 1 : index
    %c0_21 = arith.constant 0 : index
    %c0_22 = arith.constant 0 : index
    %27 = vector.load %arg1[%c1, %c0_21, %c0_22] : memref<4x32x16xf32, #tpu.memory_space<vmem>>, vector<1x32x16xf32>
    %28 = vector.shape_cast %27 : vector<1x32x16xf32> to vector<32x16xf32>
    %cst_23 = arith.constant dense<0.000000e+00> : vector<8x16xf32>
    %29 = tpu.matmul %0, %28, %cst_23 {dimension_numbers = #tpu.dot_dimension_numbers<[1], [0], [0], [1], [0, 0, 1, 1], [], []>} : vector<8x32xf32>, vector<32x16xf32>, vector<8x16xf32> -> vector<8x16xf32>
    %c1_24 = arith.constant 1 : index
    %c0_25 = arith.constant 0 : index
    %c0_26 = arith.constant 0 : index
    %30 = vector.load %arg2[%c1_24, %c0_25, %c0_26] : memref<4x32x16xf32, #tpu.memory_space<vmem>>, vector<1x32x16xf32>
    %31 = vector.shape_cast %30 : vector<1x32x16xf32> to vector<32x16xf32>
    %cst_27 = arith.constant dense<0.000000e+00> : vector<8x16xf32>
    %32 = tpu.matmul %0, %31, %cst_27 {dimension_numbers = #tpu.dot_dimension_numbers<[1], [0], [0], [1], [0, 0, 1, 1], [], []>} : vector<8x32xf32>, vector<32x16xf32>, vector<8x16xf32> -> vector<8x16xf32>
    %c1_28 = arith.constant 1 : index
    %c0_29 = arith.constant 0 : index
    %c0_30 = arith.constant 0 : index
    %33 = vector.load %arg3[%c1_28, %c0_29, %c0_30] : memref<4x32x16xf32, #tpu.memory_space<vmem>>, vector<1x32x16xf32>
    %34 = vector.shape_cast %33 : vector<1x32x16xf32> to vector<32x16xf32>
    %cst_31 = arith.constant dense<0.000000e+00> : vector<8x16xf32>
    %35 = tpu.matmul %0, %34, %cst_31 {dimension_numbers = #tpu.dot_dimension_numbers<[1], [0], [0], [1], [0, 0, 1, 1], [], []>} : vector<8x32xf32>, vector<32x16xf32>, vector<8x16xf32> -> vector<8x16xf32>
    %cst_32 = arith.constant dense<0.000000e+00> : vector<8x8xf32>
    %36 = tpu.matmul %29, %32, %cst_32 {dimension_numbers = #tpu.dot_dimension_numbers<[1], [1], [0], [0], [0, 0, 1, 0], [], []>} : vector<8x16xf32>, vector<8x16xf32>, vector<8x8xf32> -> vector<8x8xf32>
    %cst_33 = arith.constant dense<0xFF800000> : vector<8xf32>
    %37 = vector.multi_reduction <maximumf>, %36, %cst_33 [1] : vector<8x8xf32> to vector<8xf32>
    %38 = vector.shape_cast %37 : vector<8xf32> to vector<8x1xf32>
    %39 = vector.broadcast %38 : vector<8x1xf32> to vector<8x8xf32>
    %40 = arith.subf %36, %39 : vector<8x8xf32>
    %41 = math.exp %40 : vector<8x8xf32>
    %cst_34 = arith.constant dense<0.000000e+00> : vector<8xf32>
    %42 = vector.multi_reduction <add>, %41, %cst_34 [1] : vector<8x8xf32> to vector<8xf32>
    %43 = vector.shape_cast %42 : vector<8xf32> to vector<8x1xf32>
    %cst_35 = arith.constant dense<0.000000e+00> : vector<8x16xf32>
    %44 = tpu.matmul %41, %35, %cst_35 {dimension_numbers = #tpu.dot_dimension_numbers<[1], [0], [0], [1], [0, 0, 1, 1], [], []>} : vector<8x8xf32>, vector<8x16xf32>, vector<8x16xf32> -> vector<8x16xf32>
    %45 = tpu.reciprocal %43 : vector<8x1xf32> -> vector<8x1xf32>
    %46 = vector.broadcast %45 : vector<8x1xf32> to vector<8x16xf32>
    %47 = arith.mulf %44, %46 : vector<8x16xf32>
    %c1_36 = arith.constant 1 : index
    %c0_37 = arith.constant 0 : index
    %c0_38 = arith.constant 0 : index
    %48 = vector.load %arg4[%c1_36, %c0_37, %c0_38] : memref<4x16x128xf32, #tpu.memory_space<vmem>>, vector<1x16x128xf32>
    %49 = vector.shape_cast %48 : vector<1x16x128xf32> to vector<16x128xf32>
    %cst_39 = arith.constant dense<0.000000e+00> : vector<8x128xf32>
    %50 = tpu.matmul %47, %49, %cst_39 {dimension_numbers = #tpu.dot_dimension_numbers<[1], [0], [0], [1], [0, 0, 1, 1], [], []>} : vector<8x16xf32>, vector<16x128xf32>, vector<8x128xf32> -> vector<8x128xf32>
    %51 = arith.addf %26, %50 : vector<8x128xf32>
    %c2 = arith.constant 2 : index
    %c0_40 = arith.constant 0 : index
    %c0_41 = arith.constant 0 : index
    %52 = vector.load %arg1[%c2, %c0_40, %c0_41] : memref<4x32x16xf32, #tpu.memory_space<vmem>>, vector<1x32x16xf32>
    %53 = vector.shape_cast %52 : vector<1x32x16xf32> to vector<32x16xf32>
    %cst_42 = arith.constant dense<0.000000e+00> : vector<8x16xf32>
    %54 = tpu.matmul %0, %53, %cst_42 {dimension_numbers = #tpu.dot_dimension_numbers<[1], [0], [0], [1], [0, 0, 1, 1], [], []>} : vector<8x32xf32>, vector<32x16xf32>, vector<8x16xf32> -> vector<8x16xf32>
    %c2_43 = arith.constant 2 : index
    %c0_44 = arith.constant 0 : index
    %c0_45 = arith.constant 0 : index
    %55 = vector.load %arg2[%c2_43, %c0_44, %c0_45] : memref<4x32x16xf32, #tpu.memory_space<vmem>>, vector<1x32x16xf32>
    %56 = vector.shape_cast %55 : vector<1x32x16xf32> to vector<32x16xf32>
    %cst_46 = arith.constant dense<0.000000e+00> : vector<8x16xf32>
    %57 = tpu.matmul %0, %56, %cst_46 {dimension_numbers = #tpu.dot_dimension_numbers<[1], [0], [0], [1], [0, 0, 1, 1], [], []>} : vector<8x32xf32>, vector<32x16xf32>, vector<8x16xf32> -> vector<8x16xf32>
    %c2_47 = arith.constant 2 : index
    %c0_48 = arith.constant 0 : index
    %c0_49 = arith.constant 0 : index
    %58 = vector.load %arg3[%c2_47, %c0_48, %c0_49] : memref<4x32x16xf32, #tpu.memory_space<vmem>>, vector<1x32x16xf32>
    %59 = vector.shape_cast %58 : vector<1x32x16xf32> to vector<32x16xf32>
    %cst_50 = arith.constant dense<0.000000e+00> : vector<8x16xf32>
    %60 = tpu.matmul %0, %59, %cst_50 {dimension_numbers = #tpu.dot_dimension_numbers<[1], [0], [0], [1], [0, 0, 1, 1], [], []>} : vector<8x32xf32>, vector<32x16xf32>, vector<8x16xf32> -> vector<8x16xf32>
    %cst_51 = arith.constant dense<0.000000e+00> : vector<8x8xf32>
    %61 = tpu.matmul %54, %57, %cst_51 {dimension_numbers = #tpu.dot_dimension_numbers<[1], [1], [0], [0], [0, 0, 1, 0], [], []>} : vector<8x16xf32>, vector<8x16xf32>, vector<8x8xf32> -> vector<8x8xf32>
    %cst_52 = arith.constant dense<0xFF800000> : vector<8xf32>
    %62 = vector.multi_reduction <maximumf>, %61, %cst_52 [1] : vector<8x8xf32> to vector<8xf32>
    %63 = vector.shape_cast %62 : vector<8xf32> to vector<8x1xf32>
    %64 = vector.broadcast %63 : vector<8x1xf32> to vector<8x8xf32>
    %65 = arith.subf %61, %64 : vector<8x8xf32>
    %66 = math.exp %65 : vector<8x8xf32>
    %cst_53 = arith.constant dense<0.000000e+00> : vector<8xf32>
    %67 = vector.multi_reduction <add>, %66, %cst_53 [1] : vector<8x8xf32> to vector<8xf32>
    %68 = vector.shape_cast %67 : vector<8xf32> to vector<8x1xf32>
    %cst_54 = arith.constant dense<0.000000e+00> : vector<8x16xf32>
    %69 = tpu.matmul %66, %60, %cst_54 {dimension_numbers = #tpu.dot_dimension_numbers<[1], [0], [0], [1], [0, 0, 1, 1], [], []>} : vector<8x8xf32>, vector<8x16xf32>, vector<8x16xf32> -> vector<8x16xf32>
    %70 = tpu.reciprocal %68 : vector<8x1xf32> -> vector<8x1xf32>
    %71 = vector.broadcast %70 : vector<8x1xf32> to vector<8x16xf32>
    %72 = arith.mulf %69, %71 : vector<8x16xf32>
    %c2_55 = arith.constant 2 : index
    %c0_56 = arith.constant 0 : index
    %c0_57 = arith.constant 0 : index
    %73 = vector.load %arg4[%c2_55, %c0_56, %c0_57] : memref<4x16x128xf32, #tpu.memory_space<vmem>>, vector<1x16x128xf32>
    %74 = vector.shape_cast %73 : vector<1x16x128xf32> to vector<16x128xf32>
    %cst_58 = arith.constant dense<0.000000e+00> : vector<8x128xf32>
    %75 = tpu.matmul %72, %74, %cst_58 {dimension_numbers = #tpu.dot_dimension_numbers<[1], [0], [0], [1], [0, 0, 1, 1], [], []>} : vector<8x16xf32>, vector<16x128xf32>, vector<8x128xf32> -> vector<8x128xf32>
    %76 = arith.addf %51, %75 : vector<8x128xf32>
    %c3 = arith.constant 3 : index
    %c0_59 = arith.constant 0 : index
    %c0_60 = arith.constant 0 : index
    %77 = vector.load %arg1[%c3, %c0_59, %c0_60] : memref<4x32x16xf32, #tpu.memory_space<vmem>>, vector<1x32x16xf32>
    %78 = vector.shape_cast %77 : vector<1x32x16xf32> to vector<32x16xf32>
    %cst_61 = arith.constant dense<0.000000e+00> : vector<8x16xf32>
    %79 = tpu.matmul %0, %78, %cst_61 {dimension_numbers = #tpu.dot_dimension_numbers<[1], [0], [0], [1], [0, 0, 1, 1], [], []>} : vector<8x32xf32>, vector<32x16xf32>, vector<8x16xf32> -> vector<8x16xf32>
    %c3_62 = arith.constant 3 : index
    %c0_63 = arith.constant 0 : index
    %c0_64 = arith.constant 0 : index
    %80 = vector.load %arg2[%c3_62, %c0_63, %c0_64] : memref<4x32x16xf32, #tpu.memory_space<vmem>>, vector<1x32x16xf32>
    %81 = vector.shape_cast %80 : vector<1x32x16xf32> to vector<32x16xf32>
    %cst_65 = arith.constant dense<0.000000e+00> : vector<8x16xf32>
    %82 = tpu.matmul %0, %81, %cst_65 {dimension_numbers = #tpu.dot_dimension_numbers<[1], [0], [0], [1], [0, 0, 1, 1], [], []>} : vector<8x32xf32>, vector<32x16xf32>, vector<8x16xf32> -> vector<8x16xf32>
    %c3_66 = arith.constant 3 : index
    %c0_67 = arith.constant 0 : index
    %c0_68 = arith.constant 0 : index
    %83 = vector.load %arg3[%c3_66, %c0_67, %c0_68] : memref<4x32x16xf32, #tpu.memory_space<vmem>>, vector<1x32x16xf32>
    %84 = vector.shape_cast %83 : vector<1x32x16xf32> to vector<32x16xf32>
    %cst_69 = arith.constant dense<0.000000e+00> : vector<8x16xf32>
    %85 = tpu.matmul %0, %84, %cst_69 {dimension_numbers = #tpu.dot_dimension_numbers<[1], [0], [0], [1], [0, 0, 1, 1], [], []>} : vector<8x32xf32>, vector<32x16xf32>, vector<8x16xf32> -> vector<8x16xf32>
    %cst_70 = arith.constant dense<0.000000e+00> : vector<8x8xf32>
    %86 = tpu.matmul %79, %82, %cst_70 {dimension_numbers = #tpu.dot_dimension_numbers<[1], [1], [0], [0], [0, 0, 1, 0], [], []>} : vector<8x16xf32>, vector<8x16xf32>, vector<8x8xf32> -> vector<8x8xf32>
    %cst_71 = arith.constant dense<0xFF800000> : vector<8xf32>
    %87 = vector.multi_reduction <maximumf>, %86, %cst_71 [1] : vector<8x8xf32> to vector<8xf32>
    %88 = vector.shape_cast %87 : vector<8xf32> to vector<8x1xf32>
    %89 = vector.broadcast %88 : vector<8x1xf32> to vector<8x8xf32>
    %90 = arith.subf %86, %89 : vector<8x8xf32>
    %91 = math.exp %90 : vector<8x8xf32>
    %cst_72 = arith.constant dense<0.000000e+00> : vector<8xf32>
    %92 = vector.multi_reduction <add>, %91, %cst_72 [1] : vector<8x8xf32> to vector<8xf32>
    %93 = vector.shape_cast %92 : vector<8xf32> to vector<8x1xf32>
    %cst_73 = arith.constant dense<0.000000e+00> : vector<8x16xf32>
    %94 = tpu.matmul %91, %85, %cst_73 {dimension_numbers = #tpu.dot_dimension_numbers<[1], [0], [0], [1], [0, 0, 1, 1], [], []>} : vector<8x8xf32>, vector<8x16xf32>, vector<8x16xf32> -> vector<8x16xf32>
    %95 = tpu.reciprocal %93 : vector<8x1xf32> -> vector<8x1xf32>
    %96 = vector.broadcast %95 : vector<8x1xf32> to vector<8x16xf32>
    %97 = arith.mulf %94, %96 : vector<8x16xf32>
    %c3_74 = arith.constant 3 : index
    %c0_75 = arith.constant 0 : index
    %c0_76 = arith.constant 0 : index
    %98 = vector.load %arg4[%c3_74, %c0_75, %c0_76] : memref<4x16x128xf32, #tpu.memory_space<vmem>>, vector<1x16x128xf32>
    %99 = vector.shape_cast %98 : vector<1x16x128xf32> to vector<16x128xf32>
    %cst_77 = arith.constant dense<0.000000e+00> : vector<8x128xf32>
    %100 = tpu.matmul %97, %99, %cst_77 {dimension_numbers = #tpu.dot_dimension_numbers<[1], [0], [0], [1], [0, 0, 1, 1], [], []>} : vector<8x16xf32>, vector<16x128xf32>, vector<8x128xf32> -> vector<8x128xf32>
    %101 = arith.addf %76, %100 : vector<8x128xf32>
    %c0_78 = arith.constant 0 : index
    %c0_79 = arith.constant 0 : index
    %102 = vector.load %arg5[%c0_78, %c0_79] : memref<8x128xf32, #tpu.memory_space<vmem>>, vector<8x128xf32>
    tpu.vector_store %arg5[%c0_78, %c0_79], %101 {strides = array<i32>} : memref<8x128xf32, #tpu.memory_space<vmem>>, vector<8x128xf32>,
    return
  }
}

</mosaic_0001>

<llo_original>
// kernel: tpu_custom_call.1
$region0: #{tpu_custom_call.1}
  #allocation0 [shape = 'u32[]', space=smem, size = 0x4, offset = 0x4, fixed_abs, tag = 'smem constant byte address 0x4 - core index']
  #allocation1 [shape = 'u32[144,128]{1,0:T(1,128)}', space=vmem, size = 0x12000, scoped, tag = 'internal scratch']
  %s0 = inlined_call_operand.vmem [shape: f32[8,32], index: 0, kind: input, shape index: {}]
  %s1 = inlined_call_operand.vmem [shape: f32[4,32,16], index: 1, kind: input, shape index: {}]
  %s2 = inlined_call_operand.vmem [shape: f32[4,32,16], index: 2, kind: input, shape index: {}]
  %s3 = inlined_call_operand.vmem [shape: f32[4,32,16], index: 3, kind: input, shape index: {}]
  %s4 = inlined_call_operand.vmem [shape: f32[4,16,128], index: 4, kind: input, shape index: {}]
  %s5 = inlined_call_operand.hbm [shape: f32[8,128], index: 5, kind: output, shape index: {}]
  %s6 = sld [smem:[#allocation0]]
  $region30: #{tpu_custom_call.1} parent=0
    _
  %s8 = ssub.s32 1, %s6
  %s9 = scalar_select 0, %s8, %s6
  $region1: #{tpu_custom_call.1} parent=0
    #allocation2 [shape = 'u8[4096]{0}', space=vmem, size = 0x1000, scoped, tag = 'output window, operand 0, single buffered']
    #allocation3 [shape = 's32[1]{0}', space=sflag, size = 0x4, scoped, tag = 'scoped memory for tpu_custom_call.1']
    %10 = vsyncpa [#allocation3], 0
    // Predicated region
    $region2: #{tpu_custom_call.1} parent=1 // pred_check
      _
    $region3: #{tpu_custom_call.1} parent=1 // pred_check_branch
      %12 = sbr.rel (0) target = $region5
    $region4: #{tpu_custom_call.1} parent=1 // pred_region
      _
    $region5: #{tpu_custom_call.1} parent=1 // pred_fallthru
      _
    // Predicated region
    $region6: #{tpu_custom_call.1} parent=1 // pred_check
      _
    $region7: #{tpu_custom_call.1} parent=1 // pred_check_branch
      %14 = sbr.rel (0) target = $region9
    $region8: #{tpu_custom_call.1} parent=1 // pred_region
      _
    $region9: #{tpu_custom_call.1} parent=1 // pred_fallthru
      _
    // Predicated region
    $region10: #{tpu_custom_call.1} parent=1 // pred_check
      _
    $region11: #{tpu_custom_call.1} parent=1 // pred_check_branch
      %16 = sbr.rel (0) target = $region13
    $region12: #{tpu_custom_call.1} parent=1 // pred_region
      _
    $region13: #{tpu_custom_call.1} parent=1 // pred_fallthru
      _
    // Predicated region
    $region14: #{tpu_custom_call.1} parent=1 // pred_check
      _
    $region15: #{tpu_custom_call.1} parent=1 // pred_check_branch
      %18 = sbr.rel (0) target = $region17
    $region16: #{tpu_custom_call.1} parent=1 // pred_region
      _
    $region17: #{tpu_custom_call.1} parent=1 // pred_fallthru
      _
    // Predicated region
    $region18: #{tpu_custom_call.1} parent=1 // pred_check
      _
    $region19: #{tpu_custom_call.1} parent=1 // pred_check_branch
      %20 = sbr.rel (0) target = $region21
    $region20: #{tpu_custom_call.1} parent=1 // pred_region
      _
    $region21: #{tpu_custom_call.1} parent=1 // pred_fallthru
      _
    %v21 = vld [vmem:[%s0] sm:$0xff]
    %v22 = vld [vmem:[%s1] sm:$0xff]
    %v23 = vld [vmem:[%s1 + $0x8] sm:$0xff]
    %v24 = vld [vmem:[%s1 + $0x10] sm:$0xff]
    %v25 = vld [vmem:[%s1 + $0x18] sm:$0xff]
    %vm26 = vcmask 261120
    %v28 = vsel %vm26, %v21, 0
    %30 = vmatprep.subr.mxu0 0.0
    %31 = vmatpush1.msra.mxu0 %v22
    %32 = vmatprep.subr.mxu0 0.0
    %33 = vmatpush1.msra.mxu0 %v23
    %34 = vmatprep.subr.mxu0 0.0
    %35 = vmatpush1.msra.mxu0 %v24
    %36 = vmatprep.subr.mxu0 0.0
    %37 = vmatpush1.msra.mxu0 %v25
    %38 = vmatprep.subr.mxu0 0.0
    %39 = vmatpush1.msra.mxu0 0.0
    %40 = vmatprep.subr.mxu0 0.0
    %41 = vmatpush1.msra.mxu0 0.0
    %42 = vmatprep.subr.mxu0 0.0
    %43 = vmatpush1.msra.mxu0 0.0
    %44 = vmatprep.subr.mxu0 0.0
    %45 = vmatpush1.msra.mxu0 0.0
    %46 = vmatprep.subr.mxu0 0.0
    %47 = vmatpush1.msra.mxu0 0.0
    %48 = vmatprep.subr.mxu0 0.0
    %49 = vmatpush1.msra.mxu0 0.0
    %50 = vmatprep.subr.mxu0 0.0
    %51 = vmatpush1.msra.mxu0 0.0
    %52 = vmatprep.subr.mxu0 0.0
    %53 = vmatpush1.msra.mxu0 0.0
    %54 = vmatprep.subr.mxu0 0.0
    %55 = vmatpush1.msra.mxu0 0.0
    %56 = vmatprep.subr.mxu0 0.0
    %57 = vmatpush1.msra.mxu0 0.0
    %58 = vmatprep.subr.mxu0 0.0
    %59 = vmatpush1.msra.mxu0 0.0
    %60 = vmatprep.subr.mxu0 0.0
    %61 = vmatpush1.msra.mxu0 0.0
    %62 = vmatprep.subr.mxu0 0.0
    %63 = vmatpush1.msra.mxu0 0.0
    %64 = vmatprep.subr.mxu0 0.0
    %65 = vmatpush1.msra.mxu0 0.0
    %66 = vmatprep.subr.mxu0 0.0
    %67 = vmatpush1.msra.mxu0 0.0
    %68 = vmatprep.subr.mxu0 0.0
    %69 = vmatpush1.msra.mxu0 0.0
    %70 = vmatprep.subr.mxu0 0.0
    %71 = vmatpush1.msra.mxu0 0.0
    %72 = vmatprep.subr.mxu0 0.0
    %73 = vmatpush1.msra.mxu0 0.0
    %74 = vmatprep.subr.mxu0 0.0
    %75 = vmatpush1.msra.mxu0 0.0
    %76 = vmatprep.subr.mxu0 0.0
    %77 = vmatpush1.msra.mxu0 0.0
    %78 = vmatprep.subr.mxu0 0.0
    %79 = vmatpush1.msra.mxu0 0.0
    %80 = vmatprep.subr.mxu0 0.0
    %81 = vmatpush1.msra.mxu0 0.0
    %82 = vmatprep.subr.mxu0 0.0
    %83 = vmatpush1.msra.mxu0 0.0
    %84 = vmatprep.subr.mxu0 0.0
    %85 = vmatpush1.msra.mxu0 0.0
    %86 = vmatprep.subr.mxu0 0.0
    %87 = vmatpush1.msra.mxu0 0.0
    %88 = vmatprep.subr.mxu0 0.0
    %89 = vmatpush1.msra.mxu0 0.0
    %90 = vmatprep.subr.mxu0 0.0
    %91 = vmatpush1.msra.mxu0 0.0
    %92 = vmatprep.subr.mxu0 0.0
    %93 = vmatpush1.msra.mxu0 0.0
    %94 = vmatprep.mubr.f32.mxu0 0.0
    %95 = vmatmul.mubr.f32.gmra.mrb[0].mxu0 %v28
    %v96 = vpop.f32.mrb[0].mxu0
    %v97 = vadd.f32 0.0, %v96
    %v98 = vpop.f32.mrb[0].mxu0
    %99 = vdwg.mxu0
    %v100 = vld [vmem:[%s2] sm:$0xff]
    %v101 = vld [vmem:[%s2 + $0x8] sm:$0xff]
    %v102 = vld [vmem:[%s2 + $0x10] sm:$0xff]
    %v103 = vld [vmem:[%s2 + $0x18] sm:$0xff]
    %104 = vmatprep.subr.mxu0 0.0
    %105 = vmatpush1.msra.mxu0 %v100
    %106 = vmatprep.subr.mxu0 0.0
    %107 = vmatpush1.msra.mxu0 %v101
    %108 = vmatprep.subr.mxu0 0.0
    %109 = vmatpush1.msra.mxu0 %v102
    %110 = vmatprep.subr.mxu0 0.0
    %111 = vmatpush1.msra.mxu0 %v103
    %112 = vmatprep.subr.mxu0 0.0
    %113 = vmatpush1.msra.mxu0 0.0
    %114 = vmatprep.subr.mxu0 0.0
    %115 = vmatpush1.msra.mxu0 0.0
    %116 = vmatprep.subr.mxu0 0.0
    %117 = vmatpush1.msra.mxu0 0.0
    %118 = vmatprep.subr.mxu0 0.0
    %119 = vmatpush1.msra.mxu0 0.0
    %120 = vmatprep.subr.mxu0 0.0
    %121 = vmatpush1.msra.mxu0 0.0
    %122 = vmatprep.subr.mxu0 0.0
    %123 = vmatpush1.msra.mxu0 0.0
    %124 = vmatprep.subr.mxu0 0.0
    %125 = vmatpush1.msra.mxu0 0.0
    %126 = vmatprep.subr.mxu0 0.0
    %127 = vmatpush1.msra.mxu0 0.0
    %128 = vmatprep.subr.mxu0 0.0
    %129 = vmatpush1.msra.mxu0 0.0
    %130 = vmatprep.subr.mxu0 0.0
    %131 = vmatpush1.msra.mxu0 0.0
    %132 = vmatprep.subr.mxu0 0.0
    %133 = vmatpush1.msra.mxu0 0.0
    %134 = vmatprep.subr.mxu0 0.0
    %135 = vmatpush1.msra.mxu0 0.0
    %136 = vmatprep.subr.mxu0 0.0
    %137 = vmatpush1.msra.mxu0 0.0
    %138 = vmatprep.subr.mxu0 0.0
    %139 = vmatpush1.msra.mxu0 0.0
    %140 = vmatprep.subr.mxu0 0.0
    %141 = vmatpush1.msra.mxu0 0.0
    %142 = vmatprep.subr.mxu0 0.0
    %143 = vmatpush1.msra.mxu0 0.0
    %144 = vmatprep.subr.mxu0 0.0
    %145 = vmatpush1.msra.mxu0 0.0
    %146 = vmatprep.subr.mxu0 0.0
    %147 = vmatpush1.msra.mxu0 0.0
    %148 = vmatprep.subr.mxu0 0.0
    %149 = vmatpush1.msra.mxu0 0.0
    %150 = vmatprep.subr.mxu0 0.0
    %151 = vmatpush1.msra.mxu0 0.0
    %152 = vmatprep.subr.mxu0 0.0
    %153 = vmatpush1.msra.mxu0 0.0
    %154 = vmatprep.subr.mxu0 0.0
    %155 = vmatpush1.msra.mxu0 0.0
    %156 = vmatprep.subr.mxu0 0.0
    %157 = vmatpush1.msra.mxu0 0.0
    %158 = vmatprep.subr.mxu0 0.0
    %159 = vmatpush1.msra.mxu0 0.0
    %160 = vmatprep.subr.mxu0 0.0
    %161 = vmatpush1.msra.mxu0 0.0
    %162 = vmatprep.subr.mxu0 0.0
    %163 = vmatpush1.msra.mxu0 0.0
    %164 = vmatprep.subr.mxu0 0.0
    %165 = vmatpush1.msra.mxu0 0.0
    %166 = vmatprep.subr.mxu0 0.0
    %167 = vmatpush1.msra.mxu0 0.0
    %168 = vmatprep.mubr.f32.mxu0 0.0
    %169 = vmatmul.mubr.f32.gmra.mrb[0].mxu0 %v28
    %v170 = vpop.f32.mrb[0].mxu0
    %v171 = vadd.f32 0.0, %v170
    %v172 = vpop.f32.mrb[0].mxu0
    %173 = vdwg.mxu0
    %v174 = vld [vmem:[%s3] sm:$0xff]
    %v175 = vld [vmem:[%s3 + $0x8] sm:$0xff]
    %v176 = vld [vmem:[%s3 + $0x10] sm:$0xff]
    %v177 = vld [vmem:[%s3 + $0x18] sm:$0xff]
    %178 = vmatprep.subr.mxu0 0.0
    %179 = vmatpush1.msra.mxu0 %v174
    %180 = vmatprep.subr.mxu0 0.0
    %181 = vmatpush1.msra.mxu0 %v175
    %182 = vmatprep.subr.mxu0 0.0
    %183 = vmatpush1.msra.mxu0 %v176
    %184 = vmatprep.subr.mxu0 0.0
    %185 = vmatpush1.msra.mxu0 %v177
    %186 = vmatprep.subr.mxu0 0.0
    %187 = vmatpush1.msra.mxu0 0.0
    %188 = vmatprep.subr.mxu0 0.0
    %189 = vmatpush1.msra.mxu0 0.0
    %190 = vmatprep.subr.mxu0 0.0
    %191 = vmatpush1.msra.mxu0 0.0
    %192 = vmatprep.subr.mxu0 0.0
    %193 = vmatpush1.msra.mxu0 0.0
    %194 = vmatprep.subr.mxu0 0.0
    %195 = vmatpush1.msra.mxu0 0.0
    %196 = vmatprep.subr.mxu0 0.0
    %197 = vmatpush1.msra.mxu0 0.0
    %198 = vmatprep.subr.mxu0 0.0
    %199 = vmatpush1.msra.mxu0 0.0
    %200 = vmatprep.subr.mxu0 0.0
    %201 = vmatpush1.msra.mxu0 0.0
    %202 = vmatprep.subr.mxu0 0.0
    %203 = vmatpush1.msra.mxu0 0.0
    %204 = vmatprep.subr.mxu0 0.0
    %205 = vmatpush1.msra.mxu0 0.0
    %206 = vmatprep.subr.mxu0 0.0
    %207 = vmatpush1.msra.mxu0 0.0
    %208 = vmatprep.subr.mxu0 0.0
    %209 = vmatpush1.msra.mxu0 0.0
    %210 = vmatprep.subr.mxu0 0.0
    %211 = vmatpush1.msra.mxu0 0.0
    %212 = vmatprep.subr.mxu0 0.0
    %213 = vmatpush1.msra.mxu0 0.0
    %214 = vmatprep.subr.mxu0 0.0
    %215 = vmatpush1.msra.mxu0 0.0
    %216 = vmatprep.subr.mxu0 0.0
    %217 = vmatpush1.msra.mxu0 0.0
    %218 = vmatprep.subr.mxu0 0.0
    %219 = vmatpush1.msra.mxu0 0.0
    %220 = vmatprep.subr.mxu0 0.0
    %221 = vmatpush1.msra.mxu0 0.0
    %222 = vmatprep.subr.mxu0 0.0
    %223 = vmatpush1.msra.mxu0 0.0
    %224 = vmatprep.subr.mxu0 0.0
    %225 = vmatpush1.msra.mxu0 0.0
    %226 = vmatprep.subr.mxu0 0.0
    %227 = vmatpush1.msra.mxu0 0.0
    %228 = vmatprep.subr.mxu0 0.0
    %229 = vmatpush1.msra.mxu0 0.0
    %230 = vmatprep.subr.mxu0 0.0
    %231 = vmatpush1.msra.mxu0 0.0
    %232 = vmatprep.subr.mxu0 0.0
    %233 = vmatpush1.msra.mxu0 0.0
    %234 = vmatprep.subr.mxu0 0.0
    %235 = vmatpush1.msra.mxu0 0.0
    %236 = vmatprep.subr.mxu0 0.0
    %237 = vmatpush1.msra.mxu0 0.0
    %238 = vmatprep.subr.mxu0 0.0
    %239 = vmatpush1.msra.mxu0 0.0
    %240 = vmatprep.subr.mxu0 0.0
    %241 = vmatpush1.msra.mxu0 0.0
    %242 = vmatprep.mubr.f32.mxu0 0.0
    %243 = vmatmul.mubr.f32.gmra.mrb[0].mxu0 %v28
    %v244 = vpop.f32.mrb[0].mxu0
    %v245 = vadd.f32 0.0, %v244
    %v246 = vpop.f32.mrb[0].mxu0
    %247 = vdwg.mxu0
    %vm248 = vcmask 130048
    %v250 = vsel %vm248, %v97, 0
    %v253 = vsel %vm248, %v171, 0
    %255 = vmatprep.subr.mxu0 0.0
    %256 = vmatpush1.xpose.msra.mxu0 %v253
    %257 = vmatprep.subr.mxu0 0.0
    %258 = vmatpush1.xpose.msra.mxu0 0.0
    %259 = vmatprep.subr.mxu0 0.0
    %260 = vmatpush1.xpose.msra.mxu0 0.0
    %261 = vmatprep.subr.mxu0 0.0
    %262 = vmatpush1.xpose.msra.mxu0 0.0
    %263 = vmatprep.subr.mxu0 0.0
    %264 = vmatpush1.xpose.msra.mxu0 0.0
    %265 = vmatprep.subr.mxu0 0.0
    %266 = vmatpush1.xpose.msra.mxu0 0.0
    %267 = vmatprep.subr.mxu0 0.0
    %268 = vmatpush1.xpose.msra.mxu0 0.0
    %269 = vmatprep.subr.mxu0 0.0
    %270 = vmatpush1.xpose.msra.mxu0 0.0
    %271 = vmatprep.subr.mxu0 0.0
    %272 = vmatpush1.xpose.msra.mxu0 0.0
    %273 = vmatprep.subr.mxu0 0.0
    %274 = vmatpush1.xpose.msra.mxu0 0.0
    %275 = vmatprep.subr.mxu0 0.0
    %276 = vmatpush1.xpose.msra.mxu0 0.0
    %277 = vmatprep.subr.mxu0 0.0
    %278 = vmatpush1.xpose.msra.mxu0 0.0
    %279 = vmatprep.subr.mxu0 0.0
    %280 = vmatpush1.xpose.msra.mxu0 0.0
    %281 = vmatprep.subr.mxu0 0.0
    %282 = vmatpush1.xpose.msra.mxu0 0.0
    %283 = vmatprep.subr.mxu0 0.0
    %284 = vmatpush1.xpose.msra.mxu0 0.0
    %285 = vmatprep.subr.mxu0 0.0
    %286 = vmatpush1.xpose.msra.mxu0 0.0
    %287 = vmatprep.subr.mxu0 0.0
    %288 = vmatpush1.xpose.msra.mxu0 0.0
    %289 = vmatprep.subr.mxu0 0.0
    %290 = vmatpush1.xpose.msra.mxu0 0.0
    %291 = vmatprep.subr.mxu0 0.0
    %292 = vmatpush1.xpose.msra.mxu0 0.0
    %293 = vmatprep.subr.mxu0 0.0
    %294 = vmatpush1.xpose.msra.mxu0 0.0
    %295 = vmatprep.subr.mxu0 0.0
    %296 = vmatpush1.xpose.msra.mxu0 0.0
    %297 = vmatprep.subr.mxu0 0.0
    %298 = vmatpush1.xpose.msra.mxu0 0.0
    %299 = vmatprep.subr.mxu0 0.0
    %300 = vmatpush1.xpose.msra.mxu0 0.0
    %301 = vmatprep.subr.mxu0 0.0
    %302 = vmatpush1.xpose.msra.mxu0 0.0
    %303 = vmatprep.subr.mxu0 0.0
    %304 = vmatpush1.xpose.msra.mxu0 0.0
    %305 = vmatprep.subr.mxu0 0.0
    %306 = vmatpush1.xpose.msra.mxu0 0.0
    %307 = vmatprep.subr.mxu0 0.0
    %308 = vmatpush1.xpose.msra.mxu0 0.0
    %309 = vmatprep.subr.mxu0 0.0
    %310 = vmatpush1.xpose.msra.mxu0 0.0
    %311 = vmatprep.subr.mxu0 0.0
    %312 = vmatpush1.xpose.msra.mxu0 0.0
    %313 = vmatprep.subr.mxu0 0.0
    %314 = vmatpush1.xpose.msra.mxu0 0.0
    %315 = vmatprep.subr.mxu0 0.0
    %316 = vmatpush1.xpose.msra.mxu0 0.0
    %317 = vmatprep.subr.mxu0 0.0
    %318 = vmatpush1.xpose.msra.mxu0 0.0
    %319 = vmatprep.mubr.f32.mxu0 0.0
    %320 = vmatmul.mubr.f32.gmra.mrb[0].mxu0 %v250
    %v321 = vpop.f32.mrb[0].mxu0
    %v322 = vadd.f32 0.0, %v321
    %v323 = vpop.f32.mrb[0].mxu0
    %324 = vdwg.mxu0
    %vm325 = vcmask 64512
    %v326 = vsel %vm325, %v322, -inf
    %327 = vmax.xlane.f32.xlu0 %v326
    %v328 = vpop.xlane.xlu0 %327
    %v329 = vsub.f32 %v322, %v328
    %v330 = vmul.f32 %v329, 1.442695
    %v331 = vpow.pop %v330
    %v332 = vsel %vm325, %v331, 0.0
    %333 = vadd.xlane.f32.xlu0 %v332
    %v334 = vpop.xlane.xlu0 %333
    %v336 = vsel %vm325, %v331, 0
    %338 = vmatprep.subr.mxu0 0.0
    %339 = vmatpush1.msra.mxu0 %v245
    %340 = vmatprep.subr.mxu0 0.0
    %341 = vmatpush1.msra.mxu0 0.0
    %342 = vmatprep.subr.mxu0 0.0
    %343 = vmatpush1.msra.mxu0 0.0
    %344 = vmatprep.subr.mxu0 0.0
    %345 = vmatpush1.msra.mxu0 0.0
    %346 = vmatprep.subr.mxu0 0.0
    %347 = vmatpush1.msra.mxu0 0.0
    %348 = vmatprep.subr.mxu0 0.0
    %349 = vmatpush1.msra.mxu0 0.0
    %350 = vmatprep.subr.mxu0 0.0
    %351 = vmatpush1.msra.mxu0 0.0
    %352 = vmatprep.subr.mxu0 0.0
    %353 = vmatpush1.msra.mxu0 0.0
    %354 = vmatprep.subr.mxu0 0.0
    %355 = vmatpush1.msra.mxu0 0.0
    %356 = vmatprep.subr.mxu0 0.0
    %357 = vmatpush1.msra.mxu0 0.0
    %358 = vmatprep.subr.mxu0 0.0
    %359 = vmatpush1.msra.mxu0 0.0
    %360 = vmatprep.subr.mxu0 0.0
    %361 = vmatpush1.msra.mxu0 0.0
    %362 = vmatprep.subr.mxu0 0.0
    %363 = vmatpush1.msra.mxu0 0.0
    %364 = vmatprep.subr.mxu0 0.0
    %365 = vmatpush1.msra.mxu0 0.0
    %366 = vmatprep.subr.mxu0 0.0
    %367 = vmatpush1.msra.mxu0 0.0
    %368 = vmatprep.subr.mxu0 0.0
    %369 = vmatpush1.msra.mxu0 0.0
    %370 = vmatprep.subr.mxu0 0.0
    %371 = vmatpush1.msra.mxu0 0.0
    %372 = vmatprep.subr.mxu0 0.0
    %373 = vmatpush1.msra.mxu0 0.0
    %374 = vmatprep.subr.mxu0 0.0
    %375 = vmatpush1.msra.mxu0 0.0
    %376 = vmatprep.subr.mxu0 0.0
    %377 = vmatpush1.msra.mxu0 0.0
    %378 = vmatprep.subr.mxu0 0.0
    %379 = vmatpush1.msra.mxu0 0.0
    %380 = vmatprep.subr.mxu0 0.0
    %381 = vmatpush1.msra.mxu0 0.0
    %382 = vmatprep.subr.mxu0 0.0
    %383 = vmatpush1.msra.mxu0 0.0
    %384 = vmatprep.subr.mxu0 0.0
    %385 = vmatpush1.msra.mxu0 0.0
    %386 = vmatprep.subr.mxu0 0.0
    %387 = vmatpush1.msra.mxu0 0.0
    %388 = vmatprep.subr.mxu0 0.0
    %389 = vmatpush1.msra.mxu0 0.0
    %390 = vmatprep.subr.mxu0 0.0
    %391 = vmatpush1.msra.mxu0 0.0
    %392 = vmatprep.subr.mxu0 0.0
    %393 = vmatpush1.msra.mxu0 0.0
    %394 = vmatprep.subr.mxu0 0.0
    %395 = vmatpush1.msra.mxu0 0.0
    %396 = vmatprep.subr.mxu0 0.0
    %397 = vmatpush1.msra.mxu0 0.0
    %398 = vmatprep.subr.mxu0 0.0
    %399 = vmatpush1.msra.mxu0 0.0
    %400 = vmatprep.subr.mxu0 0.0
    %401 = vmatpush1.msra.mxu0 0.0
    %402 = vmatprep.mubr.f32.mxu0 0.0
    %403 = vmatmul.mubr.f32.gmra.mrb[0].mxu0 %v336
    %v404 = vpop.f32.mrb[0].mxu0
    %v405 = vadd.f32 0.0, %v404
    %v406 = vpop.f32.mrb[0].mxu0
    %407 = vdwg.mxu0
    %v408 = vrcp.pop %v334
    %v409 = vmul.f32 %v405, %v408
    %v410 = vld [vmem:[%s4] sm:$0xff]
    %v411 = vld [vmem:[%s4 + $0x8] sm:$0xff]
    %s412 = scalar_lea.vmem %s1, 32
    %v413 = vld [vmem:[%s412] sm:$0xff]
    %v414 = vld [vmem:[%s412 + $0x8] sm:$0xff]
    %v415 = vld [vmem:[%s412 + $0x10] sm:$0xff]
    %v416 = vld [vmem:[%s412 + $0x18] sm:$0xff]
    %417 = vmatprep.subr.mxu0 0.0
    %418 = vmatpush1.msra.mxu0 %v413
    %419 = vmatprep.subr.mxu0 0.0
    %420 = vmatpush1.msra.mxu0 %v414
    %421 = vmatprep.subr.mxu0 0.0
    %422 = vmatpush1.msra.mxu0 %v415
    %423 = vmatprep.subr.mxu0 0.0
    %424 = vmatpush1.msra.mxu0 %v416
    %425 = vmatprep.subr.mxu0 0.0
    %426 = vmatpush1.msra.mxu0 0.0
    %427 = vmatprep.subr.mxu0 0.0
    %428 = vmatpush1.msra.mxu0 0.0
    %429 = vmatprep.subr.mxu0 0.0
    %430 = vmatpush1.msra.mxu0 0.0
    %431 = vmatprep.subr.mxu0 0.0
    %432 = vmatpush1.msra.mxu0 0.0
    %433 = vmatprep.subr.mxu0 0.0
    %434 = vmatpush1.msra.mxu0 0.0
    %435 = vmatprep.subr.mxu0 0.0
    %436 = vmatpush1.msra.mxu0 0.0
    %437 = vmatprep.subr.mxu0 0.0
    %438 = vmatpush1.msra.mxu0 0.0
    %439 = vmatprep.subr.mxu0 0.0
    %440 = vmatpush1.msra.mxu0 0.0
    %441 = vmatprep.subr.mxu0 0.0
    %442 = vmatpush1.msra.mxu0 0.0
    %443 = vmatprep.subr.mxu0 0.0
    %444 = vmatpush1.msra.mxu0 0.0
    %445 = vmatprep.subr.mxu0 0.0
    %446 = vmatpush1.msra.mxu0 0.0
    %447 = vmatprep.subr.mxu0 0.0
    %448 = vmatpush1.msra.mxu0 0.0
    %449 = vmatprep.subr.mxu0 0.0
    %450 = vmatpush1.msra.mxu0 0.0
    %451 = vmatprep.subr.mxu0 0.0
    %452 = vmatpush1.msra.mxu0 0.0
    %453 = vmatprep.subr.mxu0 0.0
    %454 = vmatpush1.msra.mxu0 0.0
    %455 = vmatprep.subr.mxu0 0.0
    %456 = vmatpush1.msra.mxu0 0.0
    %457 = vmatprep.subr.mxu0 0.0
    %458 = vmatpush1.msra.mxu0 0.0
    %459 = vmatprep.subr.mxu0 0.0
    %460 = vmatpush1.msra.mxu0 0.0
    %461 = vmatprep.subr.mxu0 0.0
    %462 = vmatpush1.msra.mxu0 0.0
    %463 = vmatprep.subr.mxu0 0.0
    %464 = vmatpush1.msra.mxu0 0.0
    %465 = vmatprep.subr.mxu0 0.0
    %466 = vmatpush1.msra.mxu0 0.0
    %467 = vmatprep.subr.mxu0 0.0
    %468 = vmatpush1.msra.mxu0 0.0
    %469 = vmatprep.subr.mxu0 0.0
    %470 = vmatpush1.msra.mxu0 0.0
    %471 = vmatprep.subr.mxu0 0.0
    %472 = vmatpush1.msra.mxu0 0.0
    %473 = vmatprep.subr.mxu0 0.0
    %474 = vmatpush1.msra.mxu0 0.0
    %475 = vmatprep.subr.mxu0 0.0
    %476 = vmatpush1.msra.mxu0 0.0
    %477 = vmatprep.subr.mxu0 0.0
    %478 = vmatpush1.msra.mxu0 0.0
    %479 = vmatprep.subr.mxu0 0.0
    %480 = vmatpush1.msra.mxu0 0.0
    %481 = vmatprep.mubr.f32.mxu0 0.0
    %482 = vmatmul.mubr.f32.gmra.mrb[0].mxu0 %v28
    %v483 = vpop.f32.mrb[0].mxu0
    %v484 = vadd.f32 0.0, %v483
    %v485 = vpop.f32.mrb[0].mxu0
    %486 = vdwg.mxu0
    %s487 = scalar_lea.vmem %s2, 32
    %v488 = vld [vmem:[%s487] sm:$0xff]
    %v489 = vld [vmem:[%s487 + $0x8] sm:$0xff]
    %v490 = vld [vmem:[%s487 + $0x10] sm:$0xff]
    %v491 = vld [vmem:[%s487 + $0x18] sm:$0xff]
    %492 = vmatprep.subr.mxu0 0.0
    %493 = vmatpush1.msra.mxu0 %v488
    %494 = vmatprep.subr.mxu0 0.0
    %495 = vmatpush1.msra.mxu0 %v489
    %496 = vmatprep.subr.mxu0 0.0
    %497 = vmatpush1.msra.mxu0 %v490
    %498 = vmatprep.subr.mxu0 0.0
    %499 = vmatpush1.msra.mxu0 %v491
    %500 = vmatprep.subr.mxu0 0.0
    %501 = vmatpush1.msra.mxu0 0.0
    %502 = vmatprep.subr.mxu0 0.0
    %503 = vmatpush1.msra.mxu0 0.0
    %504 = vmatprep.subr.mxu0 0.0
    %505 = vmatpush1.msra.mxu0 0.0
    %506 = vmatprep.subr.mxu0 0.0
    %507 = vmatpush1.msra.mxu0 0.0
    %508 = vmatprep.subr.mxu0 0.0
    %509 = vmatpush1.msra.mxu0 0.0
    %510 = vmatprep.subr.mxu0 0.0
    %511 = vmatpush1.msra.mxu0 0.0
    %512 = vmatprep.subr.mxu0 0.0
    %513 = vmatpush1.msra.mxu0 0.0
    %514 = vmatprep.subr.mxu0 0.0
    %515 = vmatpush1.msra.mxu0 0.0
    %516 = vmatprep.subr.mxu0 0.0
    %517 = vmatpush1.msra.mxu0 0.0
    %518 = vmatprep.subr.mxu0 0.0
    %519 = vmatpush1.msra.mxu0 0.0
    %520 = vmatprep.subr.mxu0 0.0
    %521 = vmatpush1.msra.mxu0 0.0
    %522 = vmatprep.subr.mxu0 0.0
    %523 = vmatpush1.msra.mxu0 0.0
    %524 = vmatprep.subr.mxu0 0.0
    %525 = vmatpush1.msra.mxu0 0.0
    %526 = vmatprep.subr.mxu0 0.0
    %527 = vmatpush1.msra.mxu0 0.0
    %528 = vmatprep.subr.mxu0 0.0
    %529 = vmatpush1.msra.mxu0 0.0
    %530 = vmatprep.subr.mxu0 0.0
    %531 = vmatpush1.msra.mxu0 0.0
    %532 = vmatprep.subr.mxu0 0.0
    %533 = vmatpush1.msra.mxu0 0.0
    %534 = vmatprep.subr.mxu0 0.0
    %535 = vmatpush1.msra.mxu0 0.0
    %536 = vmatprep.subr.mxu0 0.0
    %537 = vmatpush1.msra.mxu0 0.0
    %538 = vmatprep.subr.mxu0 0.0
    %539 = vmatpush1.msra.mxu0 0.0
    %540 = vmatprep.subr.mxu0 0.0
    %541 = vmatpush1.msra.mxu0 0.0
    %542 = vmatprep.subr.mxu0 0.0
    %543 = vmatpush1.msra.mxu0 0.0
    %544 = vmatprep.subr.mxu0 0.0
    %545 = vmatpush1.msra.mxu0 0.0
    %546 = vmatprep.subr.mxu0 0.0
    %547 = vmatpush1.msra.mxu0 0.0
    %548 = vmatprep.subr.mxu0 0.0
    %549 = vmatpush1.msra.mxu0 0.0
    %550 = vmatprep.subr.mxu0 0.0
    %551 = vmatpush1.msra.mxu0 0.0
    %552 = vmatprep.subr.mxu0 0.0
    %553 = vmatpush1.msra.mxu0 0.0
    %554 = vmatprep.subr.mxu0 0.0
    %555 = vmatpush1.msra.mxu0 0.0
    %556 = vmatprep.mubr.f32.mxu0 0.0
    %557 = vmatmul.mubr.f32.gmra.mrb[0].mxu0 %v28
    %v558 = vpop.f32.mrb[0].mxu0
    %v559 = vadd.f32 0.0, %v558
    %v560 = vpop.f32.mrb[0].mxu0
    %561 = vdwg.mxu0
    %s562 = scalar_lea.vmem %s3, 32
    %v563 = vld [vmem:[%s562] sm:$0xff]
    %v564 = vld [vmem:[%s562 + $0x8] sm:$0xff]
    %v565 = vld [vmem:[%s562 + $0x10] sm:$0xff]
    %v566 = vld [vmem:[%s562 + $0x18] sm:$0xff]
    %567 = vmatprep.subr.mxu0 0.0
    %568 = vmatpush1.msra.mxu0 %v563
    %569 = vmatprep.subr.mxu0 0.0
    %570 = vmatpush1.msra.mxu0 %v564
    %571 = vmatprep.subr.mxu0 0.0
    %572 = vmatpush1.msra.mxu0 %v565
    %573 = vmatprep.subr.mxu0 0.0
    %574 = vmatpush1.msra.mxu0 %v566
    %575 = vmatprep.subr.mxu0 0.0
    %576 = vmatpush1.msra.mxu0 0.0
    %577 = vmatprep.subr.mxu0 0.0
    %578 = vmatpush1.msra.mxu0 0.0
    %579 = vmatprep.subr.mxu0 0.0
    %580 = vmatpush1.msra.mxu0 0.0
    %581 = vmatprep.subr.mxu0 0.0
    %582 = vmatpush1.msra.mxu0 0.0
    %583 = vmatprep.subr.mxu0 0.0
    %584 = vmatpush1.msra.mxu0 0.0
    %585 = vmatprep.subr.mxu0 0.0
    %586 = vmatpush1.msra.mxu0 0.0
    %587 = vmatprep.subr.mxu0 0.0
    %588 = vmatpush1.msra.mxu0 0.0
    %589 = vmatprep.subr.mxu0 0.0
    %590 = vmatpush1.msra.mxu0 0.0
    %591 = vmatprep.subr.mxu0 0.0
    %592 = vmatpush1.msra.mxu0 0.0
    %593 = vmatprep.subr.mxu0 0.0
    %594 = vmatpush1.msra.mxu0 0.0
    %595 = vmatprep.subr.mxu0 0.0
    %596 = vmatpush1.msra.mxu0 0.0
    %597 = vmatprep.subr.mxu0 0.0
    %598 = vmatpush1.msra.mxu0 0.0
    %599 = vmatprep.subr.mxu0 0.0
    %600 = vmatpush1.msra.mxu0 0.0
    %601 = vmatprep.subr.mxu0 0.0
    %602 = vmatpush1.msra.mxu0 0.0
    %603 = vmatprep.subr.mxu0 0.0
    %604 = vmatpush1.msra.mxu0 0.0
    %605 = vmatprep.subr.mxu0 0.0
    %606 = vmatpush1.msra.mxu0 0.0
    %607 = vmatprep.subr.mxu0 0.0
    %608 = vmatpush1.msra.mxu0 0.0
    %609 = vmatprep.subr.mxu0 0.0
    %610 = vmatpush1.msra.mxu0 0.0
    %611 = vmatprep.subr.mxu0 0.0
    %612 = vmatpush1.msra.mxu0 0.0
    %613 = vmatprep.subr.mxu0 0.0
    %614 = vmatpush1.msra.mxu0 0.0
    %615 = vmatprep.subr.mxu0 0.0
    %616 = vmatpush1.msra.mxu0 0.0
    %617 = vmatprep.subr.mxu0 0.0
    %618 = vmatpush1.msra.mxu0 0.0
    %619 = vmatprep.subr.mxu0 0.0
    %620 = vmatpush1.msra.mxu0 0.0
    %621 = vmatprep.subr.mxu0 0.0
    %622 = vmatpush1.msra.mxu0 0.0
    %623 = vmatprep.subr.mxu0 0.0
    %624 = vmatpush1.msra.mxu0 0.0
    %625 = vmatprep.subr.mxu0 0.0
    %626 = vmatpush1.msra.mxu0 0.0
    %627 = vmatprep.subr.mxu0 0.0
    %628 = vmatpush1.msra.mxu0 0.0
    %629 = vmatprep.subr.mxu0 0.0
    %630 = vmatpush1.msra.mxu0 0.0
    %631 = vmatprep.mubr.f32.mxu0 0.0
    %632 = vmatmul.mubr.f32.gmra.mrb[0].mxu0 %v28
    %v633 = vpop.f32.mrb[0].mxu0
    %v634 = vadd.f32 0.0, %v633
    %v635 = vpop.f32.mrb[0].mxu0
    %636 = vdwg.mxu0
    %v638 = vsel %vm248, %v484, 0
    %v641 = vsel %vm248, %v559, 0
    %643 = vmatprep.subr.mxu0 0.0
    %644 = vmatpush1.xpose.msra.mxu0 %v641
    %645 = vmatprep.subr.mxu0 0.0
    %646 = vmatpush1.xpose.msra.mxu0 0.0
    %647 = vmatprep.subr.mxu0 0.0
    %648 = vmatpush1.xpose.msra.mxu0 0.0
    %649 = vmatprep.subr.mxu0 0.0
    %650 = vmatpush1.xpose.msra.mxu0 0.0
    %651 = vmatprep.subr.mxu0 0.0
    %652 = vmatpush1.xpose.msra.mxu0 0.0
    %653 = vmatprep.subr.mxu0 0.0
    %654 = vmatpush1.xpose.msra.mxu0 0.0
    %655 = vmatprep.subr.mxu0 0.0
    %656 = vmatpush1.xpose.msra.mxu0 0.0
    %657 = vmatprep.subr.mxu0 0.0
    %658 = vmatpush1.xpose.msra.mxu0 0.0
    %659 = vmatprep.subr.mxu0 0.0
    %660 = vmatpush1.xpose.msra.mxu0 0.0
    %661 = vmatprep.subr.mxu0 0.0
    %662 = vmatpush1.xpose.msra.mxu0 0.0
    %663 = vmatprep.subr.mxu0 0.0
    %664 = vmatpush1.xpose.msra.mxu0 0.0
    %665 = vmatprep.subr.mxu0 0.0
    %666 = vmatpush1.xpose.msra.mxu0 0.0
    %667 = vmatprep.subr.mxu0 0.0
    %668 = vmatpush1.xpose.msra.mxu0 0.0
    %669 = vmatprep.subr.mxu0 0.0
    %670 = vmatpush1.xpose.msra.mxu0 0.0
    %671 = vmatprep.subr.mxu0 0.0
    %672 = vmatpush1.xpose.msra.mxu0 0.0
    %673 = vmatprep.subr.mxu0 0.0
    %674 = vmatpush1.xpose.msra.mxu0 0.0
    %675 = vmatprep.subr.mxu0 0.0
    %676 = vmatpush1.xpose.msra.mxu0 0.0
    %677 = vmatprep.subr.mxu0 0.0
    %678 = vmatpush1.xpose.msra.mxu0 0.0
    %679 = vmatprep.subr.mxu0 0.0
    %680 = vmatpush1.xpose.msra.mxu0 0.0
    %681 = vmatprep.subr.mxu0 0.0
    %682 = vmatpush1.xpose.msra.mxu0 0.0
    %683 = vmatprep.subr.mxu0 0.0
    %684 = vmatpush1.xpose.msra.mxu0 0.0
    %685 = vmatprep.subr.mxu0 0.0
    %686 = vmatpush1.xpose.msra.mxu0 0.0
    %687 = vmatprep.subr.mxu0 0.0
    %688 = vmatpush1.xpose.msra.mxu0 0.0
    %689 = vmatprep.subr.mxu0 0.0
    %690 = vmatpush1.xpose.msra.mxu0 0.0
    %691 = vmatprep.subr.mxu0 0.0
    %692 = vmatpush1.xpose.msra.mxu0 0.0
    %693 = vmatprep.subr.mxu0 0.0
    %694 = vmatpush1.xpose.msra.mxu0 0.0
    %695 = vmatprep.subr.mxu0 0.0
    %696 = vmatpush1.xpose.msra.mxu0 0.0
    %697 = vmatprep.subr.mxu0 0.0
    %698 = vmatpush1.xpose.msra.mxu0 0.0
    %699 = vmatprep.subr.mxu0 0.0
    %700 = vmatpush1.xpose.msra.mxu0 0.0
    %701 = vmatprep.subr.mxu0 0.0
    %702 = vmatpush1.xpose.msra.mxu0 0.0
    %703 = vmatprep.subr.mxu0 0.0
    %704 = vmatpush1.xpose.msra.mxu0 0.0
    %705 = vmatprep.subr.mxu0 0.0
    %706 = vmatpush1.xpose.msra.mxu0 0.0
    %707 = vmatprep.mubr.f32.mxu0 0.0
    %708 = vmatmul.mubr.f32.gmra.mrb[0].mxu0 %v638
    %v709 = vpop.f32.mrb[0].mxu0
    %v710 = vadd.f32 0.0, %v709
    %v711 = vpop.f32.mrb[0].mxu0
    %712 = vdwg.mxu0
    %v713 = vsel %vm325, %v710, -inf
    %714 = vmax.xlane.f32.xlu0 %v713
    %v715 = vpop.xlane.xlu0 %714
    %v716 = vsub.f32 %v710, %v715
    %v717 = vmul.f32 %v716, 1.442695
    %v718 = vpow.pop %v717
    %v719 = vsel %vm325, %v718, 0.0
    %720 = vadd.xlane.f32.xlu0 %v719
    %v721 = vpop.xlane.xlu0 %720
    %v723 = vsel %vm325, %v718, 0
    %725 = vmatprep.subr.mxu0 0.0
    %726 = vmatpush1.msra.mxu0 %v634
    %727 = vmatprep.subr.mxu0 0.0
    %728 = vmatpush1.msra.mxu0 0.0
    %729 = vmatprep.subr.mxu0 0.0
    %730 = vmatpush1.msra.mxu0 0.0
    %731 = vmatprep.subr.mxu0 0.0
    %732 = vmatpush1.msra.mxu0 0.0
    %733 = vmatprep.subr.mxu0 0.0
    %734 = vmatpush1.msra.mxu0 0.0
    %735 = vmatprep.subr.mxu0 0.0
    %736 = vmatpush1.msra.mxu0 0.0
    %737 = vmatprep.subr.mxu0 0.0
    %738 = vmatpush1.msra.mxu0 0.0
    %739 = vmatprep.subr.mxu0 0.0
    %740 = vmatpush1.msra.mxu0 0.0
    %741 = vmatprep.subr.mxu0 0.0
    %742 = vmatpush1.msra.mxu0 0.0
    %743 = vmatprep.subr.mxu0 0.0
    %744 = vmatpush1.msra.mxu0 0.0
    %745 = vmatprep.subr.mxu0 0.0
    %746 = vmatpush1.msra.mxu0 0.0
    %747 = vmatprep.subr.mxu0 0.0
    %748 = vmatpush1.msra.mxu0 0.0
    %749 = vmatprep.subr.mxu0 0.0
    %750 = vmatpush1.msra.mxu0 0.0
    %751 = vmatprep.subr.mxu0 0.0
    %752 = vmatpush1.msra.mxu0 0.0
    %753 = vmatprep.subr.mxu0 0.0
    %754 = vmatpush1.msra.mxu0 0.0
    %755 = vmatprep.subr.mxu0 0.0
    %756 = vmatpush1.msra.mxu0 0.0
    %757 = vmatprep.subr.mxu0 0.0
    %758 = vmatpush1.msra.mxu0 0.0
    %759 = vmatprep.subr.mxu0 0.0
    %760 = vmatpush1.msra.mxu0 0.0
    %761 = vmatprep.subr.mxu0 0.0
    %762 = vmatpush1.msra.mxu0 0.0
    %763 = vmatprep.subr.mxu0 0.0
    %764 = vmatpush1.msra.mxu0 0.0
    %765 = vmatprep.subr.mxu0 0.0
    %766 = vmatpush1.msra.mxu0 0.0
    %767 = vmatprep.subr.mxu0 0.0
    %768 = vmatpush1.msra.mxu0 0.0
    %769 = vmatprep.subr.mxu0 0.0
    %770 = vmatpush1.msra.mxu0 0.0
    %771 = vmatprep.subr.mxu0 0.0
    %772 = vmatpush1.msra.mxu0 0.0
    %773 = vmatprep.subr.mxu0 0.0
    %774 = vmatpush1.msra.mxu0 0.0
    %775 = vmatprep.subr.mxu0 0.0
    %776 = vmatpush1.msra.mxu0 0.0
    %777 = vmatprep.subr.mxu0 0.0
    %778 = vmatpush1.msra.mxu0 0.0
    %779 = vmatprep.subr.mxu0 0.0
    %780 = vmatpush1.msra.mxu0 0.0
    %781 = vmatprep.subr.mxu0 0.0
    %782 = vmatpush1.msra.mxu0 0.0
    %783 = vmatprep.subr.mxu0 0.0
    %784 = vmatpush1.msra.mxu0 0.0
    %785 = vmatprep.subr.mxu0 0.0
    %786 = vmatpush1.msra.mxu0 0.0
    %787 = vmatprep.subr.mxu0 0.0
    %788 = vmatpush1.msra.mxu0 0.0
    %789 = vmatprep.mubr.f32.mxu0 0.0
    %790 = vmatmul.mubr.f32.gmra.mrb[0].mxu0 %v723
    %v791 = vpop.f32.mrb[0].mxu0
    %v792 = vadd.f32 0.0, %v791
    %v793 = vpop.f32.mrb[0].mxu0
    %794 = vdwg.mxu0
    %v795 = vrcp.pop %v721
    %v796 = vmul.f32 %v792, %v795
    %s797 = scalar_lea.vmem %s4, 16
    %v798 = vld [vmem:[%s797] sm:$0xff]
    %v799 = vld [vmem:[%s797 + $0x8] sm:$0xff]
    %v801 = vsel %vm248, %v796, 0
    %803 = vmatprep.subr.mxu0 0.0
    %804 = vmatpush1.msra.mxu0 %v798
    %805 = vmatprep.subr.mxu0 0.0
    %806 = vmatpush1.msra.mxu0 %v799
    %807 = vmatprep.subr.mxu0 0.0
    %808 = vmatpush1.msra.mxu0 0.0
    %809 = vmatprep.subr.mxu0 0.0
    %810 = vmatpush1.msra.mxu0 0.0
    %811 = vmatprep.subr.mxu0 0.0
    %812 = vmatpush1.msra.mxu0 0.0
    %813 = vmatprep.subr.mxu0 0.0
    %814 = vmatpush1.msra.mxu0 0.0
    %815 = vmatprep.subr.mxu0 0.0
    %816 = vmatpush1.msra.mxu0 0.0
    %817 = vmatprep.subr.mxu0 0.0
    %818 = vmatpush1.msra.mxu0 0.0
    %819 = vmatprep.subr.mxu0 0.0
    %820 = vmatpush1.msra.mxu0 0.0
    %821 = vmatprep.subr.mxu0 0.0
    %822 = vmatpush1.msra.mxu0 0.0
    %823 = vmatprep.subr.mxu0 0.0
    %824 = vmatpush1.msra.mxu0 0.0
    %825 = vmatprep.subr.mxu0 0.0
    %826 = vmatpush1.msra.mxu0 0.0
    %827 = vmatprep.subr.mxu0 0.0
    %828 = vmatpush1.msra.mxu0 0.0
    %829 = vmatprep.subr.mxu0 0.0
    %830 = vmatpush1.msra.mxu0 0.0
    %831 = vmatprep.subr.mxu0 0.0
    %832 = vmatpush1.msra.mxu0 0.0
    %833 = vmatprep.subr.mxu0 0.0
    %834 = vmatpush1.msra.mxu0 0.0
    %835 = vmatprep.subr.mxu0 0.0
    %836 = vmatpush1.msra.mxu0 0.0
    %837 = vmatprep.subr.mxu0 0.0
    %838 = vmatpush1.msra.mxu0 0.0
    %839 = vmatprep.subr.mxu0 0.0
    %840 = vmatpush1.msra.mxu0 0.0
    %841 = vmatprep.subr.mxu0 0.0
    %842 = vmatpush1.msra.mxu0 0.0
    %843 = vmatprep.subr.mxu0 0.0
    %844 = vmatpush1.msra.mxu0 0.0
    %845 = vmatprep.subr.mxu0 0.0
    %846 = vmatpush1.msra.mxu0 0.0
    %847 = vmatprep.subr.mxu0 0.0
    %848 = vmatpush1.msra.mxu0 0.0
    %849 = vmatprep.subr.mxu0 0.0
    %850 = vmatpush1.msra.mxu0 0.0
    %851 = vmatprep.subr.mxu0 0.0
    %852 = vmatpush1.msra.mxu0 0.0
    %853 = vmatprep.subr.mxu0 0.0
    %854 = vmatpush1.msra.mxu0 0.0
    %855 = vmatprep.subr.mxu0 0.0
    %856 = vmatpush1.msra.mxu0 0.0
    %857 = vmatprep.subr.mxu0 0.0
    %858 = vmatpush1.msra.mxu0 0.0
    %859 = vmatprep.subr.mxu0 0.0
    %860 = vmatpush1.msra.mxu0 0.0
    %861 = vmatprep.subr.mxu0 0.0
    %862 = vmatpush1.msra.mxu0 0.0
    %863 = vmatprep.subr.mxu0 0.0
    %864 = vmatpush1.msra.mxu0 0.0
    %865 = vmatprep.subr.mxu0 0.0
    %866 = vmatpush1.msra.mxu0 0.0
    %867 = vmatprep.mubr.f32.mxu0 0.0
    %868 = vmatmul.mubr.f32.gmra.mrb[0].mxu0 %v801
    %v869 = vpop.f32.mrb[0].mxu0
    %v870 = vadd.f32 0.0, %v869
    %v871 = vpop.f32.mrb[0].mxu0
    %872 = vdwg.mxu0
    %v874 = vsel %vm248, %v409, 0
    %876 = vmatprep.subr.mxu0 0.0
    %877 = vmatpush1.msra.mxu0 %v410
    %878 = vmatprep.subr.mxu0 0.0
    %879 = vmatpush1.msra.mxu0 %v411
    %880 = vmatprep.subr.mxu0 0.0
    %881 = vmatpush1.msra.mxu0 0.0
    %882 = vmatprep.subr.mxu0 0.0
    %883 = vmatpush1.msra.mxu0 0.0
    %884 = vmatprep.subr.mxu0 0.0
    %885 = vmatpush1.msra.mxu0 0.0
    %886 = vmatprep.subr.mxu0 0.0
    %887 = vmatpush1.msra.mxu0 0.0
    %888 = vmatprep.subr.mxu0 0.0
    %889 = vmatpush1.msra.mxu0 0.0
    %890 = vmatprep.subr.mxu0 0.0
    %891 = vmatpush1.msra.mxu0 0.0
    %892 = vmatprep.subr.mxu0 0.0
    %893 = vmatpush1.msra.mxu0 0.0
    %894 = vmatprep.subr.mxu0 0.0
    %895 = vmatpush1.msra.mxu0 0.0
    %896 = vmatprep.subr.mxu0 0.0
    %897 = vmatpush1.msra.mxu0 0.0
    %898 = vmatprep.subr.mxu0 0.0
    %899 = vmatpush1.msra.mxu0 0.0
    %900 = vmatprep.subr.mxu0 0.0
    %901 = vmatpush1.msra.mxu0 0.0
    %902 = vmatprep.subr.mxu0 0.0
    %903 = vmatpush1.msra.mxu0 0.0
    %904 = vmatprep.subr.mxu0 0.0
    %905 = vmatpush1.msra.mxu0 0.0
    %906 = vmatprep.subr.mxu0 0.0
    %907 = vmatpush1.msra.mxu0 0.0
    %908 = vmatprep.subr.mxu0 0.0
    %909 = vmatpush1.msra.mxu0 0.0
    %910 = vmatprep.subr.mxu0 0.0
    %911 = vmatpush1.msra.mxu0 0.0
    %912 = vmatprep.subr.mxu0 0.0
    %913 = vmatpush1.msra.mxu0 0.0
    %914 = vmatprep.subr.mxu0 0.0
    %915 = vmatpush1.msra.mxu0 0.0
    %916 = vmatprep.subr.mxu0 0.0
    %917 = vmatpush1.msra.mxu0 0.0
    %918 = vmatprep.subr.mxu0 0.0
    %919 = vmatpush1.msra.mxu0 0.0
    %920 = vmatprep.subr.mxu0 0.0
    %921 = vmatpush1.msra.mxu0 0.0
    %922 = vmatprep.subr.mxu0 0.0
    %923 = vmatpush1.msra.mxu0 0.0
    %924 = vmatprep.subr.mxu0 0.0
    %925 = vmatpush1.msra.mxu0 0.0
    %926 = vmatprep.subr.mxu0 0.0
    %927 = vmatpush1.msra.mxu0 0.0
    %928 = vmatprep.subr.mxu0 0.0
    %929 = vmatpush1.msra.mxu0 0.0
    %930 = vmatprep.subr.mxu0 0.0
    %931 = vmatpush1.msra.mxu0 0.0
    %932 = vmatprep.subr.mxu0 0.0
    %933 = vmatpush1.msra.mxu0 0.0
    %934 = vmatprep.subr.mxu0 0.0
    %935 = vmatpush1.msra.mxu0 0.0
    %936 = vmatprep.subr.mxu0 0.0
    %937 = vmatpush1.msra.mxu0 0.0
    %938 = vmatprep.subr.mxu0 0.0
    %939 = vmatpush1.msra.mxu0 0.0
    %940 = vmatprep.mubr.f32.mxu0 0.0
    %941 = vmatmul.mubr.f32.gmra.mrb[0].mxu0 %v874
    %v942 = vpop.f32.mrb[0].mxu0
    %v943 = vadd.f32 %v870, %v942
    %v944 = vpop.f32.mrb[0].mxu0
    %945 = vdwg.mxu0
    %s946 = scalar_lea.vmem %s1, 64
    %v947 = vld [vmem:[%s946] sm:$0xff]
    %v948 = vld [vmem:[%s946 + $0x8] sm:$0xff]
    %v949 = vld [vmem:[%s946 + $0x10] sm:$0xff]
    %v950 = vld [vmem:[%s946 + $0x18] sm:$0xff]
    %951 = vmatprep.subr.mxu0 0.0
    %952 = vmatpush1.msra.mxu0 %v947
    %953 = vmatprep.subr.mxu0 0.0
    %954 = vmatpush1.msra.mxu0 %v948
    %955 = vmatprep.subr.mxu0 0.0
    %956 = vmatpush1.msra.mxu0 %v949
    %957 = vmatprep.subr.mxu0 0.0
    %958 = vmatpush1.msra.mxu0 %v950
    %959 = vmatprep.subr.mxu0 0.0
    %960 = vmatpush1.msra.mxu0 0.0
    %961 = vmatprep.subr.mxu0 0.0
    %962 = vmatpush1.msra.mxu0 0.0
    %963 = vmatprep.subr.mxu0 0.0
    %964 = vmatpush1.msra.mxu0 0.0
    %965 = vmatprep.subr.mxu0 0.0
    %966 = vmatpush1.msra.mxu0 0.0
    %967 = vmatprep.subr.mxu0 0.0
    %968 = vmatpush1.msra.mxu0 0.0
    %969 = vmatprep.subr.mxu0 0.0
    %970 = vmatpush1.msra.mxu0 0.0
    %971 = vmatprep.subr.mxu0 0.0
    %972 = vmatpush1.msra.mxu0 0.0
    %973 = vmatprep.subr.mxu0 0.0
    %974 = vmatpush1.msra.mxu0 0.0
    %975 = vmatprep.subr.mxu0 0.0
    %976 = vmatpush1.msra.mxu0 0.0
    %977 = vmatprep.subr.mxu0 0.0
    %978 = vmatpush1.msra.mxu0 0.0
    %979 = vmatprep.subr.mxu0 0.0
    %980 = vmatpush1.msra.mxu0 0.0
    %981 = vmatprep.subr.mxu0 0.0
    %982 = vmatpush1.msra.mxu0 0.0
    %983 = vmatprep.subr.mxu0 0.0
    %984 = vmatpush1.msra.mxu0 0.0
    %985 = vmatprep.subr.mxu0 0.0
    %986 = vmatpush1.msra.mxu0 0.0
    %987 = vmatprep.subr.mxu0 0.0
    %988 = vmatpush1.msra.mxu0 0.0
    %989 = vmatprep.subr.mxu0 0.0
    %990 = vmatpush1.msra.mxu0 0.0
    %991 = vmatprep.subr.mxu0 0.0
    %992 = vmatpush1.msra.mxu0 0.0
    %993 = vmatprep.subr.mxu0 0.0
    %994 = vmatpush1.msra.mxu0 0.0
    %995 = vmatprep.subr.mxu0 0.0
    %996 = vmatpush1.msra.mxu0 0.0
    %997 = vmatprep.subr.mxu0 0.0
    %998 = vmatpush1.msra.mxu0 0.0
    %999 = vmatprep.subr.mxu0 0.0
    %1000 = vmatpush1.msra.mxu0 0.0
    %1001 = vmatprep.subr.mxu0 0.0
    %1002 = vmatpush1.msra.mxu0 0.0
    %1003 = vmatprep.subr.mxu0 0.0
    %1004 = vmatpush1.msra.mxu0 0.0
    %1005 = vmatprep.subr.mxu0 0.0
    %1006 = vmatpush1.msra.mxu0 0.0
    %1007 = vmatprep.subr.mxu0 0.0
    %1008 = vmatpush1.msra.mxu0 0.0
    %1009 = vmatprep.subr.mxu0 0.0
    %1010 = vmatpush1.msra.mxu0 0.0
    %1011 = vmatprep.subr.mxu0 0.0
    %1012 = vmatpush1.msra.mxu0 0.0
    %1013 = vmatprep.subr.mxu0 0.0
    %1014 = vmatpush1.msra.mxu0 0.0
    %1015 = vmatprep.mubr.f32.mxu0 0.0
    %1016 = vmatmul.mubr.f32.gmra.mrb[0].mxu0 %v28
    %v1017 = vpop.f32.mrb[0].mxu0
    %v1018 = vadd.f32 0.0, %v1017
    %v1019 = vpop.f32.mrb[0].mxu0
    %1020 = vdwg.mxu0
    %s1021 = scalar_lea.vmem %s2, 64
    %v1022 = vld [vmem:[%s1021] sm:$0xff]
    %v1023 = vld [vmem:[%s1021 + $0x8] sm:$0xff]
    %v1024 = vld [vmem:[%s1021 + $0x10] sm:$0xff]
    %v1025 = vld [vmem:[%s1021 + $0x18] sm:$0xff]
    %1026 = vmatprep.subr.mxu0 0.0
    %1027 = vmatpush1.msra.mxu0 %v1022
    %1028 = vmatprep.subr.mxu0 0.0
    %1029 = vmatpush1.msra.mxu0 %v1023
    %1030 = vmatprep.subr.mxu0 0.0
    %1031 = vmatpush1.msra.mxu0 %v1024
    %1032 = vmatprep.subr.mxu0 0.0
    %1033 = vmatpush1.msra.mxu0 %v1025
    %1034 = vmatprep.subr.mxu0 0.0
    %1035 = vmatpush1.msra.mxu0 0.0
    %1036 = vmatprep.subr.mxu0 0.0
    %1037 = vmatpush1.msra.mxu0 0.0
    %1038 = vmatprep.subr.mxu0 0.0
    %1039 = vmatpush1.msra.mxu0 0.0
    %1040 = vmatprep.subr.mxu0 0.0
    %1041 = vmatpush1.msra.mxu0 0.0
    %1042 = vmatprep.subr.mxu0 0.0
    %1043 = vmatpush1.msra.mxu0 0.0
    %1044 = vmatprep.subr.mxu0 0.0
    %1045 = vmatpush1.msra.mxu0 0.0
    %1046 = vmatprep.subr.mxu0 0.0
    %1047 = vmatpush1.msra.mxu0 0.0
    %1048 = vmatprep.subr.mxu0 0.0
    %1049 = vmatpush1.msra.mxu0 0.0
    %1050 = vmatprep.subr.mxu0 0.0
    %1051 = vmatpush1.msra.mxu0 0.0
    %1052 = vmatprep.subr.mxu0 0.0
    %1053 = vmatpush1.msra.mxu0 0.0
    %1054 = vmatprep.subr.mxu0 0.0
    %1055 = vmatpush1.msra.mxu0 0.0
    %1056 = vmatprep.subr.mxu0 0.0
    %1057 = vmatpush1.msra.mxu0 0.0
    %1058 = vmatprep.subr.mxu0 0.0
    %1059 = vmatpush1.msra.mxu0 0.0
    %1060 = vmatprep.subr.mxu0 0.0
    %1061 = vmatpush1.msra.mxu0 0.0
    %1062 = vmatprep.subr.mxu0 0.0
    %1063 = vmatpush1.msra.mxu0 0.0
    %1064 = vmatprep.subr.mxu0 0.0
    %1065 = vmatpush1.msra.mxu0 0.0
    %1066 = vmatprep.subr.mxu0 0.0
    %1067 = vmatpush1.msra.mxu0 0.0
    %1068 = vmatprep.subr.mxu0 0.0
    %1069 = vmatpush1.msra.mxu0 0.0
    %1070 = vmatprep.subr.mxu0 0.0
    %1071 = vmatpush1.msra.mxu0 0.0
    %1072 = vmatprep.subr.mxu0 0.0
    %1073 = vmatpush1.msra.mxu0 0.0
    %1074 = vmatprep.subr.mxu0 0.0
    %1075 = vmatpush1.msra.mxu0 0.0
    %1076 = vmatprep.subr.mxu0 0.0
    %1077 = vmatpush1.msra.mxu0 0.0
    %1078 = vmatprep.subr.mxu0 0.0
    %1079 = vmatpush1.msra.mxu0 0.0
    %1080 = vmatprep.subr.mxu0 0.0
    %1081 = vmatpush1.msra.mxu0 0.0
    %1082 = vmatprep.subr.mxu0 0.0
    %1083 = vmatpush1.msra.mxu0 0.0
    %1084 = vmatprep.subr.mxu0 0.0
    %1085 = vmatpush1.msra.mxu0 0.0
    %1086 = vmatprep.subr.mxu0 0.0
    %1087 = vmatpush1.msra.mxu0 0.0
    %1088 = vmatprep.subr.mxu0 0.0
    %1089 = vmatpush1.msra.mxu0 0.0
    %1090 = vmatprep.mubr.f32.mxu0 0.0
    %1091 = vmatmul.mubr.f32.gmra.mrb[0].mxu0 %v28
    %v1092 = vpop.f32.mrb[0].mxu0
    %v1093 = vadd.f32 0.0, %v1092
    %v1094 = vpop.f32.mrb[0].mxu0
    %1095 = vdwg.mxu0
    %s1096 = scalar_lea.vmem %s3, 64
    %v1097 = vld [vmem:[%s1096] sm:$0xff]
    %v1098 = vld [vmem:[%s1096 + $0x8] sm:$0xff]
    %v1099 = vld [vmem:[%s1096 + $0x10] sm:$0xff]
    %v1100 = vld [vmem:[%s1096 + $0x18] sm:$0xff]
    %1101 = vmatprep.subr.mxu0 0.0
    %1102 = vmatpush1.msra.mxu0 %v1097
    %1103 = vmatprep.subr.mxu0 0.0
    %1104 = vmatpush1.msra.mxu0 %v1098
    %1105 = vmatprep.subr.mxu0 0.0
    %1106 = vmatpush1.msra.mxu0 %v1099
    %1107 = vmatprep.subr.mxu0 0.0
    %1108 = vmatpush1.msra.mxu0 %v1100
    %1109 = vmatprep.subr.mxu0 0.0
    %1110 = vmatpush1.msra.mxu0 0.0
    %1111 = vmatprep.subr.mxu0 0.0
    %1112 = vmatpush1.msra.mxu0 0.0
    %1113 = vmatprep.subr.mxu0 0.0
    %1114 = vmatpush1.msra.mxu0 0.0
    %1115 = vmatprep.subr.mxu0 0.0
    %1116 = vmatpush1.msra.mxu0 0.0
    %1117 = vmatprep.subr.mxu0 0.0
    %1118 = vmatpush1.msra.mxu0 0.0
    %1119 = vmatprep.subr.mxu0 0.0
    %1120 = vmatpush1.msra.mxu0 0.0
    %1121 = vmatprep.subr.mxu0 0.0
    %1122 = vmatpush1.msra.mxu0 0.0
    %1123 = vmatprep.subr.mxu0 0.0
    %1124 = vmatpush1.msra.mxu0 0.0
    %1125 = vmatprep.subr.mxu0 0.0
    %1126 = vmatpush1.msra.mxu0 0.0
    %1127 = vmatprep.subr.mxu0 0.0
    %1128 = vmatpush1.msra.mxu0 0.0
    %1129 = vmatprep.subr.mxu0 0.0
    %1130 = vmatpush1.msra.mxu0 0.0
    %1131 = vmatprep.subr.mxu0 0.0
    %1132 = vmatpush1.msra.mxu0 0.0
    %1133 = vmatprep.subr.mxu0 0.0
    %1134 = vmatpush1.msra.mxu0 0.0
    %1135 = vmatprep.subr.mxu0 0.0
    %1136 = vmatpush1.msra.mxu0 0.0
    %1137 = vmatprep.subr.mxu0 0.0
    %1138 = vmatpush1.msra.mxu0 0.0
    %1139 = vmatprep.subr.mxu0 0.0
    %1140 = vmatpush1.msra.mxu0 0.0
    %1141 = vmatprep.subr.mxu0 0.0
    %1142 = vmatpush1.msra.mxu0 0.0
    %1143 = vmatprep.subr.mxu0 0.0
    %1144 = vmatpush1.msra.mxu0 0.0
    %1145 = vmatprep.subr.mxu0 0.0
    %1146 = vmatpush1.msra.mxu0 0.0
    %1147 = vmatprep.subr.mxu0 0.0
    %1148 = vmatpush1.msra.mxu0 0.0
    %1149 = vmatprep.subr.mxu0 0.0
    %1150 = vmatpush1.msra.mxu0 0.0
    %1151 = vmatprep.subr.mxu0 0.0
    %1152 = vmatpush1.msra.mxu0 0.0
    %1153 = vmatprep.subr.mxu0 0.0
    %1154 = vmatpush1.msra.mxu0 0.0
    %1155 = vmatprep.subr.mxu0 0.0
    %1156 = vmatpush1.msra.mxu0 0.0
    %1157 = vmatprep.subr.mxu0 0.0
    %1158 = vmatpush1.msra.mxu0 0.0
    %1159 = vmatprep.subr.mxu0 0.0
    %1160 = vmatpush1.msra.mxu0 0.0
    %1161 = vmatprep.subr.mxu0 0.0
    %1162 = vmatpush1.msra.mxu0 0.0
    %1163 = vmatprep.subr.mxu0 0.0
    %1164 = vmatpush1.msra.mxu0 0.0
    %1165 = vmatprep.mubr.f32.mxu0 0.0
    %1166 = vmatmul.mubr.f32.gmra.mrb[0].mxu0 %v28
    %v1167 = vpop.f32.mrb[0].mxu0
    %v1168 = vadd.f32 0.0, %v1167
    %v1169 = vpop.f32.mrb[0].mxu0
    %1170 = vdwg.mxu0
    %v1172 = vsel %vm248, %v1018, 0
    %v1175 = vsel %vm248, %v1093, 0
    %1177 = vmatprep.subr.mxu0 0.0
    %1178 = vmatpush1.xpose.msra.mxu0 %v1175
    %1179 = vmatprep.subr.mxu0 0.0
    %1180 = vmatpush1.xpose.msra.mxu0 0.0
    %1181 = vmatprep.subr.mxu0 0.0
    %1182 = vmatpush1.xpose.msra.mxu0 0.0
    %1183 = vmatprep.subr.mxu0 0.0
    %1184 = vmatpush1.xpose.msra.mxu0 0.0
    %1185 = vmatprep.subr.mxu0 0.0
    %1186 = vmatpush1.xpose.msra.mxu0 0.0
    %1187 = vmatprep.subr.mxu0 0.0
    %1188 = vmatpush1.xpose.msra.mxu0 0.0
    %1189 = vmatprep.subr.mxu0 0.0
    %1190 = vmatpush1.xpose.msra.mxu0 0.0
    %1191 = vmatprep.subr.mxu0 0.0
    %1192 = vmatpush1.xpose.msra.mxu0 0.0
    %1193 = vmatprep.subr.mxu0 0.0
    %1194 = vmatpush1.xpose.msra.mxu0 0.0
    %1195 = vmatprep.subr.mxu0 0.0
    %1196 = vmatpush1.xpose.msra.mxu0 0.0
    %1197 = vmatprep.subr.mxu0 0.0
    %1198 = vmatpush1.xpose.msra.mxu0 0.0
    %1199 = vmatprep.subr.mxu0 0.0
    %1200 = vmatpush1.xpose.msra.mxu0 0.0
    %1201 = vmatprep.subr.mxu0 0.0
    %1202 = vmatpush1.xpose.msra.mxu0 0.0
    %1203 = vmatprep.subr.mxu0 0.0
    %1204 = vmatpush1.xpose.msra.mxu0 0.0
    %1205 = vmatprep.subr.mxu0 0.0
    %1206 = vmatpush1.xpose.msra.mxu0 0.0
    %1207 = vmatprep.subr.mxu0 0.0
    %1208 = vmatpush1.xpose.msra.mxu0 0.0
    %1209 = vmatprep.subr.mxu0 0.0
    %1210 = vmatpush1.xpose.msra.mxu0 0.0
    %1211 = vmatprep.subr.mxu0 0.0
    %1212 = vmatpush1.xpose.msra.mxu0 0.0
    %1213 = vmatprep.subr.mxu0 0.0
    %1214 = vmatpush1.xpose.msra.mxu0 0.0
    %1215 = vmatprep.subr.mxu0 0.0
    %1216 = vmatpush1.xpose.msra.mxu0 0.0
    %1217 = vmatprep.subr.mxu0 0.0
    %1218 = vmatpush1.xpose.msra.mxu0 0.0
    %1219 = vmatprep.subr.mxu0 0.0
    %1220 = vmatpush1.xpose.msra.mxu0 0.0
    %1221 = vmatprep.subr.mxu0 0.0
    %1222 = vmatpush1.xpose.msra.mxu0 0.0
    %1223 = vmatprep.subr.mxu0 0.0
    %1224 = vmatpush1.xpose.msra.mxu0 0.0
    %1225 = vmatprep.subr.mxu0 0.0
    %1226 = vmatpush1.xpose.msra.mxu0 0.0
    %1227 = vmatprep.subr.mxu0 0.0
    %1228 = vmatpush1.xpose.msra.mxu0 0.0
    %1229 = vmatprep.subr.mxu0 0.0
    %1230 = vmatpush1.xpose.msra.mxu0 0.0
    %1231 = vmatprep.subr.mxu0 0.0
    %1232 = vmatpush1.xpose.msra.mxu0 0.0
    %1233 = vmatprep.subr.mxu0 0.0
    %1234 = vmatpush1.xpose.msra.mxu0 0.0
    %1235 = vmatprep.subr.mxu0 0.0
    %1236 = vmatpush1.xpose.msra.mxu0 0.0
    %1237 = vmatprep.subr.mxu0 0.0
    %1238 = vmatpush1.xpose.msra.mxu0 0.0
    %1239 = vmatprep.subr.mxu0 0.0
    %1240 = vmatpush1.xpose.msra.mxu0 0.0
    %1241 = vmatprep.mubr.f32.mxu0 0.0
    %1242 = vmatmul.mubr.f32.gmra.mrb[0].mxu0 %v1172
    %v1243 = vpop.f32.mrb[0].mxu0
    %v1244 = vadd.f32 0.0, %v1243
    %v1245 = vpop.f32.mrb[0].mxu0
    %1246 = vdwg.mxu0
    %v1247 = vsel %vm325, %v1244, -inf
    %1248 = vmax.xlane.f32.xlu0 %v1247
    %v1249 = vpop.xlane.xlu0 %1248
    %v1250 = vsub.f32 %v1244, %v1249
    %v1251 = vmul.f32 %v1250, 1.442695
    %v1252 = vpow.pop %v1251
    %v1253 = vsel %vm325, %v1252, 0.0
    %1254 = vadd.xlane.f32.xlu0 %v1253
    %v1255 = vpop.xlane.xlu0 %1254
    %v1257 = vsel %vm325, %v1252, 0
    %1259 = vmatprep.subr.mxu0 0.0
    %1260 = vmatpush1.msra.mxu0 %v1168
    %1261 = vmatprep.subr.mxu0 0.0
    %1262 = vmatpush1.msra.mxu0 0.0
    %1263 = vmatprep.subr.mxu0 0.0
    %1264 = vmatpush1.msra.mxu0 0.0
    %1265 = vmatprep.subr.mxu0 0.0
    %1266 = vmatpush1.msra.mxu0 0.0
    %1267 = vmatprep.subr.mxu0 0.0
    %1268 = vmatpush1.msra.mxu0 0.0
    %1269 = vmatprep.subr.mxu0 0.0
    %1270 = vmatpush1.msra.mxu0 0.0
    %1271 = vmatprep.subr.mxu0 0.0
    %1272 = vmatpush1.msra.mxu0 0.0
    %1273 = vmatprep.subr.mxu0 0.0
    %1274 = vmatpush1.msra.mxu0 0.0
    %1275 = vmatprep.subr.mxu0 0.0
    %1276 = vmatpush1.msra.mxu0 0.0
    %1277 = vmatprep.subr.mxu0 0.0
    %1278 = vmatpush1.msra.mxu0 0.0
    %1279 = vmatprep.subr.mxu0 0.0
    %1280 = vmatpush1.msra.mxu0 0.0
    %1281 = vmatprep.subr.mxu0 0.0
    %1282 = vmatpush1.msra.mxu0 0.0
    %1283 = vmatprep.subr.mxu0 0.0
    %1284 = vmatpush1.msra.mxu0 0.0
    %1285 = vmatprep.subr.mxu0 0.0
    %1286 = vmatpush1.msra.mxu0 0.0
    %1287 = vmatprep.subr.mxu0 0.0
    %1288 = vmatpush1.msra.mxu0 0.0
    %1289 = vmatprep.subr.mxu0 0.0
    %1290 = vmatpush1.msra.mxu0 0.0
    %1291 = vmatprep.subr.mxu0 0.0
    %1292 = vmatpush1.msra.mxu0 0.0
    %1293 = vmatprep.subr.mxu0 0.0
    %1294 = vmatpush1.msra.mxu0 0.0
    %1295 = vmatprep.subr.mxu0 0.0
    %1296 = vmatpush1.msra.mxu0 0.0
    %1297 = vmatprep.subr.mxu0 0.0
    %1298 = vmatpush1.msra.mxu0 0.0
    %1299 = vmatprep.subr.mxu0 0.0
    %1300 = vmatpush1.msra.mxu0 0.0
    %1301 = vmatprep.subr.mxu0 0.0
    %1302 = vmatpush1.msra.mxu0 0.0
    %1303 = vmatprep.subr.mxu0 0.0
    %1304 = vmatpush1.msra.mxu0 0.0
    %1305 = vmatprep.subr.mxu0 0.0
    %1306 = vmatpush1.msra.mxu0 0.0
    %1307 = vmatprep.subr.mxu0 0.0
    %1308 = vmatpush1.msra.mxu0 0.0
    %1309 = vmatprep.subr.mxu0 0.0
    %1310 = vmatpush1.msra.mxu0 0.0
    %1311 = vmatprep.subr.mxu0 0.0
    %1312 = vmatpush1.msra.mxu0 0.0
    %1313 = vmatprep.subr.mxu0 0.0
    %1314 = vmatpush1.msra.mxu0 0.0
    %1315 = vmatprep.subr.mxu0 0.0
    %1316 = vmatpush1.msra.mxu0 0.0
    %1317 = vmatprep.subr.mxu0 0.0
    %1318 = vmatpush1.msra.mxu0 0.0
    %1319 = vmatprep.subr.mxu0 0.0
    %1320 = vmatpush1.msra.mxu0 0.0
    %1321 = vmatprep.subr.mxu0 0.0
    %1322 = vmatpush1.msra.mxu0 0.0
    %1323 = vmatprep.mubr.f32.mxu0 0.0
    %1324 = vmatmul.mubr.f32.gmra.mrb[0].mxu0 %v1257
    %v1325 = vpop.f32.mrb[0].mxu0
    %v1326 = vadd.f32 0.0, %v1325
    %v1327 = vpop.f32.mrb[0].mxu0
    %1328 = vdwg.mxu0
    %v1329 = vrcp.pop %v1255
    %v1330 = vmul.f32 %v1326, %v1329
    %s1331 = scalar_lea.vmem %s4, 32
    %v1332 = vld [vmem:[%s1331] sm:$0xff]
    %v1333 = vld [vmem:[%s1331 + $0x8] sm:$0xff]
    %v1335 = vsel %vm248, %v1330, 0
    %1337 = vmatprep.subr.mxu0 0.0
    %1338 = vmatpush1.msra.mxu0 %v1332
    %1339 = vmatprep.subr.mxu0 0.0
    %1340 = vmatpush1.msra.mxu0 %v1333
    %1341 = vmatprep.subr.mxu0 0.0
    %1342 = vmatpush1.msra.mxu0 0.0
    %1343 = vmatprep.subr.mxu0 0.0
    %1344 = vmatpush1.msra.mxu0 0.0
    %1345 = vmatprep.subr.mxu0 0.0
    %1346 = vmatpush1.msra.mxu0 0.0
    %1347 = vmatprep.subr.mxu0 0.0
    %1348 = vmatpush1.msra.mxu0 0.0
    %1349 = vmatprep.subr.mxu0 0.0
    %1350 = vmatpush1.msra.mxu0 0.0
    %1351 = vmatprep.subr.mxu0 0.0
    %1352 = vmatpush1.msra.mxu0 0.0
    %1353 = vmatprep.subr.mxu0 0.0
    %1354 = vmatpush1.msra.mxu0 0.0
    %1355 = vmatprep.subr.mxu0 0.0
    %1356 = vmatpush1.msra.mxu0 0.0
    %1357 = vmatprep.subr.mxu0 0.0
    %1358 = vmatpush1.msra.mxu0 0.0
    %1359 = vmatprep.subr.mxu0 0.0
    %1360 = vmatpush1.msra.mxu0 0.0
    %1361 = vmatprep.subr.mxu0 0.0
    %1362 = vmatpush1.msra.mxu0 0.0
    %1363 = vmatprep.subr.mxu0 0.0
    %1364 = vmatpush1.msra.mxu0 0.0
    %1365 = vmatprep.subr.mxu0 0.0
    %1366 = vmatpush1.msra.mxu0 0.0
    %1367 = vmatprep.subr.mxu0 0.0
    %1368 = vmatpush1.msra.mxu0 0.0
    %1369 = vmatprep.subr.mxu0 0.0
    %1370 = vmatpush1.msra.mxu0 0.0
    %1371 = vmatprep.subr.mxu0 0.0
    %1372 = vmatpush1.msra.mxu0 0.0
    %1373 = vmatprep.subr.mxu0 0.0
    %1374 = vmatpush1.msra.mxu0 0.0
    %1375 = vmatprep.subr.mxu0 0.0
    %1376 = vmatpush1.msra.mxu0 0.0
    %1377 = vmatprep.subr.mxu0 0.0
    %1378 = vmatpush1.msra.mxu0 0.0
    %1379 = vmatprep.subr.mxu0 0.0
    %1380 = vmatpush1.msra.mxu0 0.0
    %1381 = vmatprep.subr.mxu0 0.0
    %1382 = vmatpush1.msra.mxu0 0.0
    %1383 = vmatprep.subr.mxu0 0.0
    %1384 = vmatpush1.msra.mxu0 0.0
    %1385 = vmatprep.subr.mxu0 0.0
    %1386 = vmatpush1.msra.mxu0 0.0
    %1387 = vmatprep.subr.mxu0 0.0
    %1388 = vmatpush1.msra.mxu0 0.0
    %1389 = vmatprep.subr.mxu0 0.0
    %1390 = vmatpush1.msra.mxu0 0.0
    %1391 = vmatprep.subr.mxu0 0.0
    %1392 = vmatpush1.msra.mxu0 0.0
    %1393 = vmatprep.subr.mxu0 0.0
    %1394 = vmatpush1.msra.mxu0 0.0
    %1395 = vmatprep.subr.mxu0 0.0
    %1396 = vmatpush1.msra.mxu0 0.0
    %1397 = vmatprep.subr.mxu0 0.0
    %1398 = vmatpush1.msra.mxu0 0.0
    %1399 = vmatprep.subr.mxu0 0.0
    %1400 = vmatpush1.msra.mxu0 0.0
    %1401 = vmatprep.mubr.f32.mxu0 0.0
    %1402 = vmatmul.mubr.f32.gmra.mrb[0].mxu0 %v1335
    %v1403 = vpop.f32.mrb[0].mxu0
    %v1404 = vadd.f32 0.0, %v1403
    %v1405 = vpop.f32.mrb[0].mxu0
    %1406 = vdwg.mxu0
    %v1407 = vadd.f32 %v943, %v1404
    %s1408 = scalar_lea.vmem %s1, 96
    %v1409 = vld [vmem:[%s1408] sm:$0xff]
    %v1410 = vld [vmem:[%s1408 + $0x8] sm:$0xff]
    %v1411 = vld [vmem:[%s1408 + $0x10] sm:$0xff]
    %v1412 = vld [vmem:[%s1408 + $0x18] sm:$0xff]
    %1413 = vmatprep.subr.mxu0 0.0
    %1414 = vmatpush1.msra.mxu0 %v1409
    %1415 = vmatprep.subr.mxu0 0.0
    %1416 = vmatpush1.msra.mxu0 %v1410
    %1417 = vmatprep.subr.mxu0 0.0
    %1418 = vmatpush1.msra.mxu0 %v1411
    %1419 = vmatprep.subr.mxu0 0.0
    %1420 = vmatpush1.msra.mxu0 %v1412
    %1421 = vmatprep.subr.mxu0 0.0
    %1422 = vmatpush1.msra.mxu0 0.0
    %1423 = vmatprep.subr.mxu0 0.0
    %1424 = vmatpush1.msra.mxu0 0.0
    %1425 = vmatprep.subr.mxu0 0.0
    %1426 = vmatpush1.msra.mxu0 0.0
    %1427 = vmatprep.subr.mxu0 0.0
    %1428 = vmatpush1.msra.mxu0 0.0
    %1429 = vmatprep.subr.mxu0 0.0
    %1430 = vmatpush1.msra.mxu0 0.0
    %1431 = vmatprep.subr.mxu0 0.0
    %1432 = vmatpush1.msra.mxu0 0.0
    %1433 = vmatprep.subr.mxu0 0.0
    %1434 = vmatpush1.msra.mxu0 0.0
    %1435 = vmatprep.subr.mxu0 0.0
    %1436 = vmatpush1.msra.mxu0 0.0
    %1437 = vmatprep.subr.mxu0 0.0
    %1438 = vmatpush1.msra.mxu0 0.0
    %1439 = vmatprep.subr.mxu0 0.0
    %1440 = vmatpush1.msra.mxu0 0.0
    %1441 = vmatprep.subr.mxu0 0.0
    %1442 = vmatpush1.msra.mxu0 0.0
    %1443 = vmatprep.subr.mxu0 0.0
    %1444 = vmatpush1.msra.mxu0 0.0
    %1445 = vmatprep.subr.mxu0 0.0
    %1446 = vmatpush1.msra.mxu0 0.0
    %1447 = vmatprep.subr.mxu0 0.0
    %1448 = vmatpush1.msra.mxu0 0.0
    %1449 = vmatprep.subr.mxu0 0.0
    %1450 = vmatpush1.msra.mxu0 0.0
    %1451 = vmatprep.subr.mxu0 0.0
    %1452 = vmatpush1.msra.mxu0 0.0
    %1453 = vmatprep.subr.mxu0 0.0
    %1454 = vmatpush1.msra.mxu0 0.0
    %1455 = vmatprep.subr.mxu0 0.0
    %1456 = vmatpush1.msra.mxu0 0.0
    %1457 = vmatprep.subr.mxu0 0.0
    %1458 = vmatpush1.msra.mxu0 0.0
    %1459 = vmatprep.subr.mxu0 0.0
    %1460 = vmatpush1.msra.mxu0 0.0
    %1461 = vmatprep.subr.mxu0 0.0
    %1462 = vmatpush1.msra.mxu0 0.0
    %1463 = vmatprep.subr.mxu0 0.0
    %1464 = vmatpush1.msra.mxu0 0.0
    %1465 = vmatprep.subr.mxu0 0.0
    %1466 = vmatpush1.msra.mxu0 0.0
    %1467 = vmatprep.subr.mxu0 0.0
    %1468 = vmatpush1.msra.mxu0 0.0
    %1469 = vmatprep.subr.mxu0 0.0
    %1470 = vmatpush1.msra.mxu0 0.0
    %1471 = vmatprep.subr.mxu0 0.0
    %1472 = vmatpush1.msra.mxu0 0.0
    %1473 = vmatprep.subr.mxu0 0.0
    %1474 = vmatpush1.msra.mxu0 0.0
    %1475 = vmatprep.subr.mxu0 0.0
    %1476 = vmatpush1.msra.mxu0 0.0
    %1477 = vmatprep.mubr.f32.mxu0 0.0
    %1478 = vmatmul.mubr.f32.gmra.mrb[0].mxu0 %v28
    %v1479 = vpop.f32.mrb[0].mxu0
    %v1480 = vadd.f32 0.0, %v1479
    %v1481 = vpop.f32.mrb[0].mxu0
    %1482 = vdwg.mxu0
    %s1483 = scalar_lea.vmem %s2, 96
    %v1484 = vld [vmem:[%s1483] sm:$0xff]
    %v1485 = vld [vmem:[%s1483 + $0x8] sm:$0xff]
    %v1486 = vld [vmem:[%s1483 + $0x10] sm:$0xff]
    %v1487 = vld [vmem:[%s1483 + $0x18] sm:$0xff]
    %1488 = vmatprep.subr.mxu0 0.0
    %1489 = vmatpush1.msra.mxu0 %v1484
    %1490 = vmatprep.subr.mxu0 0.0
    %1491 = vmatpush1.msra.mxu0 %v1485
    %1492 = vmatprep.subr.mxu0 0.0
    %1493 = vmatpush1.msra.mxu0 %v1486
    %1494 = vmatprep.subr.mxu0 0.0
    %1495 = vmatpush1.msra.mxu0 %v1487
    %1496 = vmatprep.subr.mxu0 0.0
    %1497 = vmatpush1.msra.mxu0 0.0
    %1498 = vmatprep.subr.mxu0 0.0
    %1499 = vmatpush1.msra.mxu0 0.0
    %1500 = vmatprep.subr.mxu0 0.0
    %1501 = vmatpush1.msra.mxu0 0.0
    %1502 = vmatprep.subr.mxu0 0.0
    %1503 = vmatpush1.msra.mxu0 0.0
    %1504 = vmatprep.subr.mxu0 0.0
    %1505 = vmatpush1.msra.mxu0 0.0
    %1506 = vmatprep.subr.mxu0 0.0
    %1507 = vmatpush1.msra.mxu0 0.0
    %1508 = vmatprep.subr.mxu0 0.0
    %1509 = vmatpush1.msra.mxu0 0.0
    %1510 = vmatprep.subr.mxu0 0.0
    %1511 = vmatpush1.msra.mxu0 0.0
    %1512 = vmatprep.subr.mxu0 0.0
    %1513 = vmatpush1.msra.mxu0 0.0
    %1514 = vmatprep.subr.mxu0 0.0
    %1515 = vmatpush1.msra.mxu0 0.0
    %1516 = vmatprep.subr.mxu0 0.0
    %1517 = vmatpush1.msra.mxu0 0.0
    %1518 = vmatprep.subr.mxu0 0.0
    %1519 = vmatpush1.msra.mxu0 0.0
    %1520 = vmatprep.subr.mxu0 0.0
    %1521 = vmatpush1.msra.mxu0 0.0
    %1522 = vmatprep.subr.mxu0 0.0
    %1523 = vmatpush1.msra.mxu0 0.0
    %1524 = vmatprep.subr.mxu0 0.0
    %1525 = vmatpush1.msra.mxu0 0.0
    %1526 = vmatprep.subr.mxu0 0.0
    %1527 = vmatpush1.msra.mxu0 0.0
    %1528 = vmatprep.subr.mxu0 0.0
    %1529 = vmatpush1.msra.mxu0 0.0
    %1530 = vmatprep.subr.mxu0 0.0
    %1531 = vmatpush1.msra.mxu0 0.0
    %1532 = vmatprep.subr.mxu0 0.0
    %1533 = vmatpush1.msra.mxu0 0.0
    %1534 = vmatprep.subr.mxu0 0.0
    %1535 = vmatpush1.msra.mxu0 0.0
    %1536 = vmatprep.subr.mxu0 0.0
    %1537 = vmatpush1.msra.mxu0 0.0
    %1538 = vmatprep.subr.mxu0 0.0
    %1539 = vmatpush1.msra.mxu0 0.0
    %1540 = vmatprep.subr.mxu0 0.0
    %1541 = vmatpush1.msra.mxu0 0.0
    %1542 = vmatprep.subr.mxu0 0.0
    %1543 = vmatpush1.msra.mxu0 0.0
    %1544 = vmatprep.subr.mxu0 0.0
    %1545 = vmatpush1.msra.mxu0 0.0
    %1546 = vmatprep.subr.mxu0 0.0
    %1547 = vmatpush1.msra.mxu0 0.0
    %1548 = vmatprep.subr.mxu0 0.0
    %1549 = vmatpush1.msra.mxu0 0.0
    %1550 = vmatprep.subr.mxu0 0.0
    %1551 = vmatpush1.msra.mxu0 0.0
    %1552 = vmatprep.mubr.f32.mxu0 0.0
    %1553 = vmatmul.mubr.f32.gmra.mrb[0].mxu0 %v28
    %v1554 = vpop.f32.mrb[0].mxu0
    %v1555 = vadd.f32 0.0, %v1554
    %v1556 = vpop.f32.mrb[0].mxu0
    %1557 = vdwg.mxu0
    %s1558 = scalar_lea.vmem %s3, 96
    %v1559 = vld [vmem:[%s1558] sm:$0xff]
    %v1560 = vld [vmem:[%s1558 + $0x8] sm:$0xff]
    %v1561 = vld [vmem:[%s1558 + $0x10] sm:$0xff]
    %v1562 = vld [vmem:[%s1558 + $0x18] sm:$0xff]
    %1563 = vmatprep.subr.mxu0 0.0
    %1564 = vmatpush1.msra.mxu0 %v1559
    %1565 = vmatprep.subr.mxu0 0.0
    %1566 = vmatpush1.msra.mxu0 %v1560
    %1567 = vmatprep.subr.mxu0 0.0
    %1568 = vmatpush1.msra.mxu0 %v1561
    %1569 = vmatprep.subr.mxu0 0.0
    %1570 = vmatpush1.msra.mxu0 %v1562
    %1571 = vmatprep.subr.mxu0 0.0
    %1572 = vmatpush1.msra.mxu0 0.0
    %1573 = vmatprep.subr.mxu0 0.0
    %1574 = vmatpush1.msra.mxu0 0.0
    %1575 = vmatprep.subr.mxu0 0.0
    %1576 = vmatpush1.msra.mxu0 0.0
    %1577 = vmatprep.subr.mxu0 0.0
    %1578 = vmatpush1.msra.mxu0 0.0
    %1579 = vmatprep.subr.mxu0 0.0
    %1580 = vmatpush1.msra.mxu0 0.0
    %1581 = vmatprep.subr.mxu0 0.0
    %1582 = vmatpush1.msra.mxu0 0.0
    %1583 = vmatprep.subr.mxu0 0.0
    %1584 = vmatpush1.msra.mxu0 0.0
    %1585 = vmatprep.subr.mxu0 0.0
    %1586 = vmatpush1.msra.mxu0 0.0
    %1587 = vmatprep.subr.mxu0 0.0
    %1588 = vmatpush1.msra.mxu0 0.0
    %1589 = vmatprep.subr.mxu0 0.0
    %1590 = vmatpush1.msra.mxu0 0.0
    %1591 = vmatprep.subr.mxu0 0.0
    %1592 = vmatpush1.msra.mxu0 0.0
    %1593 = vmatprep.subr.mxu0 0.0
    %1594 = vmatpush1.msra.mxu0 0.0
    %1595 = vmatprep.subr.mxu0 0.0
    %1596 = vmatpush1.msra.mxu0 0.0
    %1597 = vmatprep.subr.mxu0 0.0
    %1598 = vmatpush1.msra.mxu0 0.0
    %1599 = vmatprep.subr.mxu0 0.0
    %1600 = vmatpush1.msra.mxu0 0.0
    %1601 = vmatprep.subr.mxu0 0.0
    %1602 = vmatpush1.msra.mxu0 0.0
    %1603 = vmatprep.subr.mxu0 0.0
    %1604 = vmatpush1.msra.mxu0 0.0
    %1605 = vmatprep.subr.mxu0 0.0
    %1606 = vmatpush1.msra.mxu0 0.0
    %1607 = vmatprep.subr.mxu0 0.0
    %1608 = vmatpush1.msra.mxu0 0.0
    %1609 = vmatprep.subr.mxu0 0.0
    %1610 = vmatpush1.msra.mxu0 0.0
    %1611 = vmatprep.subr.mxu0 0.0
    %1612 = vmatpush1.msra.mxu0 0.0
    %1613 = vmatprep.subr.mxu0 0.0
    %1614 = vmatpush1.msra.mxu0 0.0
    %1615 = vmatprep.subr.mxu0 0.0
    %1616 = vmatpush1.msra.mxu0 0.0
    %1617 = vmatprep.subr.mxu0 0.0
    %1618 = vmatpush1.msra.mxu0 0.0
    %1619 = vmatprep.subr.mxu0 0.0
    %1620 = vmatpush1.msra.mxu0 0.0
    %1621 = vmatprep.subr.mxu0 0.0
    %1622 = vmatpush1.msra.mxu0 0.0
    %1623 = vmatprep.subr.mxu0 0.0
    %1624 = vmatpush1.msra.mxu0 0.0
    %1625 = vmatprep.subr.mxu0 0.0
    %1626 = vmatpush1.msra.mxu0 0.0
    %1627 = vmatprep.mubr.f32.mxu0 0.0
    %1628 = vmatmul.mubr.f32.gmra.mrb[0].mxu0 %v28
    %v1629 = vpop.f32.mrb[0].mxu0
    %v1630 = vadd.f32 0.0, %v1629
    %v1631 = vpop.f32.mrb[0].mxu0
    %1632 = vdwg.mxu0
    %v1634 = vsel %vm248, %v1480, 0
    %v1637 = vsel %vm248, %v1555, 0
    %1639 = vmatprep.subr.mxu0 0.0
    %1640 = vmatpush1.xpose.msra.mxu0 %v1637
    %1641 = vmatprep.subr.mxu0 0.0
    %1642 = vmatpush1.xpose.msra.mxu0 0.0
    %1643 = vmatprep.subr.mxu0 0.0
    %1644 = vmatpush1.xpose.msra.mxu0 0.0
    %1645 = vmatprep.subr.mxu0 0.0
    %1646 = vmatpush1.xpose.msra.mxu0 0.0
    %1647 = vmatprep.subr.mxu0 0.0
    %1648 = vmatpush1.xpose.msra.mxu0 0.0
    %1649 = vmatprep.subr.mxu0 0.0
    %1650 = vmatpush1.xpose.msra.mxu0 0.0
    %1651 = vmatprep.subr.mxu0 0.0
    %1652 = vmatpush1.xpose.msra.mxu0 0.0
    %1653 = vmatprep.subr.mxu0 0.0
    %1654 = vmatpush1.xpose.msra.mxu0 0.0
    %1655 = vmatprep.subr.mxu0 0.0
    %1656 = vmatpush1.xpose.msra.mxu0 0.0
    %1657 = vmatprep.subr.mxu0 0.0
    %1658 = vmatpush1.xpose.msra.mxu0 0.0
    %1659 = vmatprep.subr.mxu0 0.0
    %1660 = vmatpush1.xpose.msra.mxu0 0.0
    %1661 = vmatprep.subr.mxu0 0.0
    %1662 = vmatpush1.xpose.msra.mxu0 0.0
    %1663 = vmatprep.subr.mxu0 0.0
    %1664 = vmatpush1.xpose.msra.mxu0 0.0
    %1665 = vmatprep.subr.mxu0 0.0
    %1666 = vmatpush1.xpose.msra.mxu0 0.0
    %1667 = vmatprep.subr.mxu0 0.0
    %1668 = vmatpush1.xpose.msra.mxu0 0.0
    %1669 = vmatprep.subr.mxu0 0.0
    %1670 = vmatpush1.xpose.msra.mxu0 0.0
    %1671 = vmatprep.subr.mxu0 0.0
    %1672 = vmatpush1.xpose.msra.mxu0 0.0
    %1673 = vmatprep.subr.mxu0 0.0
    %1674 = vmatpush1.xpose.msra.mxu0 0.0
    %1675 = vmatprep.subr.mxu0 0.0
    %1676 = vmatpush1.xpose.msra.mxu0 0.0
    %1677 = vmatprep.subr.mxu0 0.0
    %1678 = vmatpush1.xpose.msra.mxu0 0.0
    %1679 = vmatprep.subr.mxu0 0.0
    %1680 = vmatpush1.xpose.msra.mxu0 0.0
    %1681 = vmatprep.subr.mxu0 0.0
    %1682 = vmatpush1.xpose.msra.mxu0 0.0
    %1683 = vmatprep.subr.mxu0 0.0
    %1684 = vmatpush1.xpose.msra.mxu0 0.0
    %1685 = vmatprep.subr.mxu0 0.0
    %1686 = vmatpush1.xpose.msra.mxu0 0.0
    %1687 = vmatprep.subr.mxu0 0.0
    %1688 = vmatpush1.xpose.msra.mxu0 0.0
    %1689 = vmatprep.subr.mxu0 0.0
    %1690 = vmatpush1.xpose.msra.mxu0 0.0
    %1691 = vmatprep.subr.mxu0 0.0
    %1692 = vmatpush1.xpose.msra.mxu0 0.0
    %1693 = vmatprep.subr.mxu0 0.0
    %1694 = vmatpush1.xpose.msra.mxu0 0.0
    %1695 = vmatprep.subr.mxu0 0.0
    %1696 = vmatpush1.xpose.msra.mxu0 0.0
    %1697 = vmatprep.subr.mxu0 0.0
    %1698 = vmatpush1.xpose.msra.mxu0 0.0
    %1699 = vmatprep.subr.mxu0 0.0
    %1700 = vmatpush1.xpose.msra.mxu0 0.0
    %1701 = vmatprep.subr.mxu0 0.0
    %1702 = vmatpush1.xpose.msra.mxu0 0.0
    %1703 = vmatprep.mubr.f32.mxu0 0.0
    %1704 = vmatmul.mubr.f32.gmra.mrb[0].mxu0 %v1634
    %v1705 = vpop.f32.mrb[0].mxu0
    %v1706 = vadd.f32 0.0, %v1705
    %v1707 = vpop.f32.mrb[0].mxu0
    %1708 = vdwg.mxu0
    %v1709 = vsel %vm325, %v1706, -inf
    %1710 = vmax.xlane.f32.xlu0 %v1709
    %v1711 = vpop.xlane.xlu0 %1710
    %v1712 = vsub.f32 %v1706, %v1711
    %v1713 = vmul.f32 %v1712, 1.442695
    %v1714 = vpow.pop %v1713
    %v1715 = vsel %vm325, %v1714, 0.0
    %1716 = vadd.xlane.f32.xlu0 %v1715
    %v1717 = vpop.xlane.xlu0 %1716
    %v1719 = vsel %vm325, %v1714, 0
    %1721 = vmatprep.subr.mxu0 0.0
    %1722 = vmatpush1.msra.mxu0 %v1630
    %1723 = vmatprep.subr.mxu0 0.0
    %1724 = vmatpush1.msra.mxu0 0.0
    %1725 = vmatprep.subr.mxu0 0.0
    %1726 = vmatpush1.msra.mxu0 0.0
    %1727 = vmatprep.subr.mxu0 0.0
    %1728 = vmatpush1.msra.mxu0 0.0
    %1729 = vmatprep.subr.mxu0 0.0
    %1730 = vmatpush1.msra.mxu0 0.0
    %1731 = vmatprep.subr.mxu0 0.0
    %1732 = vmatpush1.msra.mxu0 0.0
    %1733 = vmatprep.subr.mxu0 0.0
    %1734 = vmatpush1.msra.mxu0 0.0
    %1735 = vmatprep.subr.mxu0 0.0
    %1736 = vmatpush1.msra.mxu0 0.0
    %1737 = vmatprep.subr.mxu0 0.0
    %1738 = vmatpush1.msra.mxu0 0.0
    %1739 = vmatprep.subr.mxu0 0.0
    %1740 = vmatpush1.msra.mxu0 0.0
    %1741 = vmatprep.subr.mxu0 0.0
    %1742 = vmatpush1.msra.mxu0 0.0
    %1743 = vmatprep.subr.mxu0 0.0
    %1744 = vmatpush1.msra.mxu0 0.0
    %1745 = vmatprep.subr.mxu0 0.0
    %1746 = vmatpush1.msra.mxu0 0.0
    %1747 = vmatprep.subr.mxu0 0.0
    %1748 = vmatpush1.msra.mxu0 0.0
    %1749 = vmatprep.subr.mxu0 0.0
    %1750 = vmatpush1.msra.mxu0 0.0
    %1751 = vmatprep.subr.mxu0 0.0
    %1752 = vmatpush1.msra.mxu0 0.0
    %1753 = vmatprep.subr.mxu0 0.0
    %1754 = vmatpush1.msra.mxu0 0.0
    %1755 = vmatprep.subr.mxu0 0.0
    %1756 = vmatpush1.msra.mxu0 0.0
    %1757 = vmatprep.subr.mxu0 0.0
    %1758 = vmatpush1.msra.mxu0 0.0
    %1759 = vmatprep.subr.mxu0 0.0
    %1760 = vmatpush1.msra.mxu0 0.0
    %1761 = vmatprep.subr.mxu0 0.0
    %1762 = vmatpush1.msra.mxu0 0.0
    %1763 = vmatprep.subr.mxu0 0.0
    %1764 = vmatpush1.msra.mxu0 0.0
    %1765 = vmatprep.subr.mxu0 0.0
    %1766 = vmatpush1.msra.mxu0 0.0
    %1767 = vmatprep.subr.mxu0 0.0
    %1768 = vmatpush1.msra.mxu0 0.0
    %1769 = vmatprep.subr.mxu0 0.0
    %1770 = vmatpush1.msra.mxu0 0.0
    %1771 = vmatprep.subr.mxu0 0.0
    %1772 = vmatpush1.msra.mxu0 0.0
    %1773 = vmatprep.subr.mxu0 0.0
    %1774 = vmatpush1.msra.mxu0 0.0
    %1775 = vmatprep.subr.mxu0 0.0
    %1776 = vmatpush1.msra.mxu0 0.0
    %1777 = vmatprep.subr.mxu0 0.0
    %1778 = vmatpush1.msra.mxu0 0.0
    %1779 = vmatprep.subr.mxu0 0.0
    %1780 = vmatpush1.msra.mxu0 0.0
    %1781 = vmatprep.subr.mxu0 0.0
    %1782 = vmatpush1.msra.mxu0 0.0
    %1783 = vmatprep.subr.mxu0 0.0
    %1784 = vmatpush1.msra.mxu0 0.0
    %1785 = vmatprep.mubr.f32.mxu0 0.0
    %1786 = vmatmul.mubr.f32.gmra.mrb[0].mxu0 %v1719
    %v1787 = vpop.f32.mrb[0].mxu0
    %v1788 = vadd.f32 0.0, %v1787
    %v1789 = vpop.f32.mrb[0].mxu0
    %1790 = vdwg.mxu0
    %v1791 = vrcp.pop %v1717
    %v1792 = vmul.f32 %v1788, %v1791
    %s1793 = scalar_lea.vmem %s4, 48
    %v1794 = vld [vmem:[%s1793] sm:$0xff]
    %v1795 = vld [vmem:[%s1793 + $0x8] sm:$0xff]
    %v1797 = vsel %vm248, %v1792, 0
    %1799 = vmatprep.subr.mxu0 0.0
    %1800 = vmatpush1.msra.mxu0 %v1794
    %1801 = vmatprep.subr.mxu0 0.0
    %1802 = vmatpush1.msra.mxu0 %v1795
    %1803 = vmatprep.subr.mxu0 0.0
    %1804 = vmatpush1.msra.mxu0 0.0
    %1805 = vmatprep.subr.mxu0 0.0
    %1806 = vmatpush1.msra.mxu0 0.0
    %1807 = vmatprep.subr.mxu0 0.0
    %1808 = vmatpush1.msra.mxu0 0.0
    %1809 = vmatprep.subr.mxu0 0.0
    %1810 = vmatpush1.msra.mxu0 0.0
    %1811 = vmatprep.subr.mxu0 0.0
    %1812 = vmatpush1.msra.mxu0 0.0
    %1813 = vmatprep.subr.mxu0 0.0
    %1814 = vmatpush1.msra.mxu0 0.0
    %1815 = vmatprep.subr.mxu0 0.0
    %1816 = vmatpush1.msra.mxu0 0.0
    %1817 = vmatprep.subr.mxu0 0.0
    %1818 = vmatpush1.msra.mxu0 0.0
    %1819 = vmatprep.subr.mxu0 0.0
    %1820 = vmatpush1.msra.mxu0 0.0
    %1821 = vmatprep.subr.mxu0 0.0
    %1822 = vmatpush1.msra.mxu0 0.0
    %1823 = vmatprep.subr.mxu0 0.0
    %1824 = vmatpush1.msra.mxu0 0.0
    %1825 = vmatprep.subr.mxu0 0.0
    %1826 = vmatpush1.msra.mxu0 0.0
    %1827 = vmatprep.subr.mxu0 0.0
    %1828 = vmatpush1.msra.mxu0 0.0
    %1829 = vmatprep.subr.mxu0 0.0
    %1830 = vmatpush1.msra.mxu0 0.0
    %1831 = vmatprep.subr.mxu0 0.0
    %1832 = vmatpush1.msra.mxu0 0.0
    %1833 = vmatprep.subr.mxu0 0.0
    %1834 = vmatpush1.msra.mxu0 0.0
    %1835 = vmatprep.subr.mxu0 0.0
    %1836 = vmatpush1.msra.mxu0 0.0
    %1837 = vmatprep.subr.mxu0 0.0
    %1838 = vmatpush1.msra.mxu0 0.0
    %1839 = vmatprep.subr.mxu0 0.0
    %1840 = vmatpush1.msra.mxu0 0.0
    %1841 = vmatprep.subr.mxu0 0.0
    %1842 = vmatpush1.msra.mxu0 0.0
    %1843 = vmatprep.subr.mxu0 0.0
    %1844 = vmatpush1.msra.mxu0 0.0
    %1845 = vmatprep.subr.mxu0 0.0
    %1846 = vmatpush1.msra.mxu0 0.0
    %1847 = vmatprep.subr.mxu0 0.0
    %1848 = vmatpush1.msra.mxu0 0.0
    %1849 = vmatprep.subr.mxu0 0.0
    %1850 = vmatpush1.msra.mxu0 0.0
    %1851 = vmatprep.subr.mxu0 0.0
    %1852 = vmatpush1.msra.mxu0 0.0
    %1853 = vmatprep.subr.mxu0 0.0
    %1854 = vmatpush1.msra.mxu0 0.0
    %1855 = vmatprep.subr.mxu0 0.0
    %1856 = vmatpush1.msra.mxu0 0.0
    %1857 = vmatprep.subr.mxu0 0.0
    %1858 = vmatpush1.msra.mxu0 0.0
    %1859 = vmatprep.subr.mxu0 0.0
    %1860 = vmatpush1.msra.mxu0 0.0
    %1861 = vmatprep.subr.mxu0 0.0
    %1862 = vmatpush1.msra.mxu0 0.0
    %1863 = vmatprep.mubr.f32.mxu0 0.0
    %1864 = vmatmul.mubr.f32.gmra.mrb[0].mxu0 %v1797
    %v1865 = vpop.f32.mrb[0].mxu0
    %v1866 = vadd.f32 0.0, %v1865
    %v1867 = vpop.f32.mrb[0].mxu0
    %1868 = vdwg.mxu0
    %v1869 = vadd.f32 %v1407, %v1866
    %1870 = vst [vmem:[#allocation2] sm:$0xff] %v1869
    // Predicated region
    $region22: #{tpu_custom_call.1} parent=1 // pred_check
      _
    $region23: #{tpu_custom_call.1} parent=1 // pred_check_branch
      %1872 = sbr.rel (0) target = $region25
    $region24: #{tpu_custom_call.1} parent=1 // pred_region
      %s1874 = ssub.s32 128, 128
      %1875 = vsyncadd [#allocation3], %s1874
      %s1877 = sshll.u32 [#allocation2], 4
      %s1878 = int_to_ptr.vmem [resolvable:$true] %s1877
      %1880 = dma.vmem_to_hbm [thread:$0]  %s1878, 128, %s5, [#allocation3]
    $region25: #{tpu_custom_call.1} parent=1 // pred_fallthru
      _
    // Predicated region
    $region26: #{tpu_custom_call.1} parent=1 // pred_check
      _
    $region27: #{tpu_custom_call.1} parent=1 // pred_check_branch
      %1882 = sbr.rel (0) target = $region29
    $region28: #{tpu_custom_call.1} parent=1 // pred_region
      %1883 = dma.done [#allocation3], 128
    $region29: #{tpu_custom_call.1} parent=1 // pred_fallthru
      _
    %1884 = vsyncpa [#allocation3], 1

</llo_original>
